<compile_context>
chip_gen: v5e
topology: v5e:2x2
jax: 0.10.0
libtpu: 0.0.40
codegen_flags: <defaults>
</compile_context>

<pallas_src>
from collections import OrderedDict

import jax
import jax.numpy as jnp
from jax.experimental import pallas as pl
from jax.experimental.pallas import tpu as pltpu


# ----------------------------------------------------------------------------
# Pallas kernel: fused attention-map extraction + A@V + output projection.
# One grid step per batch element; all heads handled together.
# ----------------------------------------------------------------------------
def _attn_block_kernel(q_ref, k_ref, v_ref, wproj_ref, bproj_ref,
                       attn_ref, out_ref):
    # blocks (leading batch dim squeezed):
    #   q/k/v : (H, N, D) f32
    #   wproj : (H, D, E) f32   (proj_w rows regrouped head-major in wrapper)
    #   bproj : (1, E)    f32
    #   attn  : (H, N*N)  f32   lane-dense flattened attention map
    #   out   : (N, E)    f32   projected attention output (pre-residual)
    q = q_ref[...]
    k = k_ref[...]
    v = v_ref[...]

    H, N, D = q.shape
    E = out_ref.shape[-1]
    scale = 1.0 / (D ** 0.5)

    # Scale Q (N*D elems) rather than the (N, N) score tile, and contract the
    # trailing axis of both operands (K consumed in natural [N, D] layout, no
    # explicit transpose).
    s = jnp.einsum("hqd,hkd->hqk", q * scale, k,
                   preferred_element_type=jnp.float32)            # (H, N, N)

    # Numerically-stable softmax along keys.  Exact division: the attention
    # map is the user-visible extracted product, so rows must sum to 1.
    m = jnp.max(s, axis=-1, keepdims=True)
    e = jnp.exp(s - m)
    p = e / jnp.sum(e, axis=-1, keepdims=True)                    # (H, N, N)

    # Lane-dense store of the extracted map: last dim N*N = 256 (2 x 128
    # lanes) gives unmasked vst instead of 16-lane masked partial stores.
    attn_ref[...] = p.reshape(H, N * N).astype(attn_ref.dtype)

    # Fused A@V: the N^2 score tile never leaves VMEM.
    ctx = jnp.einsum("hqk,hkd->hqd", p, v,
                     preferred_element_type=jnp.float32)          # (H, N, D)

    # Fused output projection: (N, H*D) @ (H*D, E) expressed as a per-head
    # sum of small matmuls (avoids any in-kernel transpose/reshape of ctx).
    wproj = wproj_ref[...]                                        # (H, D, E)
    acc = jnp.zeros((N, E), jnp.float32)
    for h in range(H):            # static unroll, H is tiny
        acc = acc + jnp.dot(ctx[h], wproj[h],
                            preferred_element_type=jnp.float32)   # (N, E)
    out_ref[...] = (acc + bproj_ref[...]).astype(out_ref.dtype)


def attn_block_pallas(q, k, v, proj_w, proj_b):
    """q, k, v: [B, H, N, D] f32;  proj_w: [E, E];  proj_b: [E].

    Returns:
      attn      [B, H, N, N] f32 : softmax(Q K^T * scale)   (extracted node)
      proj_out  [B, N, E]    f32 : (attn @ V, heads merged) @ proj_w + proj_b
    """
    B, H, N, D = q.shape
    E = proj_w.shape[-1]
    wproj = proj_w.reshape(H, D, E)      # head-major row groups of proj_w
    bproj = proj_b.reshape(1, E)

    qkv_spec = pl.BlockSpec((pl.Squeezed(), H, N, D), lambda b: (b, 0, 0, 0))
    attn_flat, out = pl.pallas_call(
        _attn_block_kernel,
        out_shape=(
            jax.ShapeDtypeStruct((B, H, N * N), jnp.float32),
            jax.ShapeDtypeStruct((B, N, E), jnp.float32),
        ),
        grid_spec=pltpu.PrefetchScalarGridSpec(
            num_scalar_prefetch=0,
            grid=(B,),
            in_specs=[
                qkv_spec, qkv_spec, qkv_spec,
                pl.BlockSpec((H, D, E), lambda b: (0, 0, 0)),
                pl.BlockSpec((1, E), lambda b: (0, 0)),
            ],
            out_specs=(
                pl.BlockSpec((pl.Squeezed(), H, N * N), lambda b: (b, 0, 0)),
                pl.BlockSpec((pl.Squeezed(), N, E), lambda b: (b, 0, 0)),
            ),
        ),
        compiler_params=pltpu.CompilerParams(
            dimension_semantics=("parallel",),   # B=2 -> one batch per TC on v7x
        ),
    )(q, k, v, wproj, bproj)

    # metadata-only reshape back to the PyTorch-facing (B, H, N, N) layout
    return attn_flat.reshape(B, H, N, N), out


# ----------------------------------------------------------------------------
# Small deterministic ViT-ish model (plain-JAX glue around the Pallas kernel)
# ----------------------------------------------------------------------------
def layer_norm(x, gamma, beta, eps=1e-6):
    mu = jnp.mean(x, axis=-1, keepdims=True)
    var = jnp.var(x, axis=-1, keepdims=True)
    return (x - mu) * jax.lax.rsqrt(var + eps) * gamma + beta


def init_params(key, in_chans, embed_dim, num_heads, depth, patch, mlp_ratio=2.0):
    hidden = int(embed_dim * mlp_ratio)
    keys = jax.random.split(key, 2 + depth * 8)
    ki = iter(keys)
    s = 0.02
    p = {
        "patch_w": s * jax.random.normal(next(ki), (in_chans * patch * patch, embed_dim), jnp.float32),
        "patch_b": jnp.zeros((embed_dim,), jnp.float32),
        "pos": s * jax.random.normal(next(ki), (1, (16 // patch) ** 2, embed_dim), jnp.float32),
        "blocks": [],
    }
    for _ in range(depth):
        blk = {
            "ln1_g": jnp.ones((embed_dim,), jnp.float32),
            "ln1_b": jnp.zeros((embed_dim,), jnp.float32),
            "qkv_w": s * jax.random.normal(next(ki), (embed_dim, 3 * embed_dim), jnp.float32),
            "qkv_b": jnp.zeros((3 * embed_dim,), jnp.float32),
            "proj_w": s * jax.random.normal(next(ki), (embed_dim, embed_dim), jnp.float32),
            "proj_b": jnp.zeros((embed_dim,), jnp.float32),
            "ln2_g": jnp.ones((embed_dim,), jnp.float32),
            "ln2_b": jnp.zeros((embed_dim,), jnp.float32),
            "fc1_w": s * jax.random.normal(next(ki), (embed_dim, hidden), jnp.float32),
            "fc1_b": jnp.zeros((hidden,), jnp.float32),
            "fc2_w": s * jax.random.normal(next(ki), (hidden, embed_dim), jnp.float32),
            "fc2_b": jnp.zeros((embed_dim,), jnp.float32),
        }
        # consume remaining per-block keys deterministically
        next(ki), next(ki), next(ki), next(ki)
        p["blocks"].append(blk)
    return p


def attention_extract_forward(params, x, num_heads):
    """Equivalent of AttentionExtract(model).forward(x) with default node names
    ['*attn.softmax']: returns OrderedDict of per-block attention maps."""
    B, C, H, W = x.shape
    patch = 4
    E = params["patch_w"].shape[1]
    D = E // num_heads

    # patch embed (conv k=stride=patch expressed as unfold + matmul)
    xp = x.reshape(B, C, H // patch, patch, W // patch, patch)
    xp = xp.transpose(0, 2, 4, 1, 3, 5).reshape(B, (H // patch) * (W // patch), C * patch * patch)
    tok = xp @ params["patch_w"] + params["patch_b"]           # [B, N, E]
    tok = tok + params["pos"]
    N = tok.shape[1]

    outputs = OrderedDict()
    for i, blk in enumerate(params["blocks"]):
        y = layer_norm(tok, blk["ln1_g"], blk["ln1_b"])
        qkv = y @ blk["qkv_w"] + blk["qkv_b"]                  # [B, N, 3E]
        qkv = qkv.reshape(B, N, 3, num_heads, D).transpose(2, 0, 3, 1, 4)
        q, k, v = qkv[0], qkv[1], qkv[2]                       # each [B, H, N, D]

        # --- extracted node: attn.softmax (Pallas kernel, fused with A@V and
        #     the output projection); attn_drop is identity in eval mode ------
        attn, proj_out = attn_block_pallas(q, k, v, blk["proj_w"], blk["proj_b"])
        outputs[f"blocks.{i}.attn.softmax"] = attn             # [B, H, N, N]

        tok = tok + proj_out                                   # residual

        y2 = layer_norm(tok, blk["ln2_g"], blk["ln2_b"])
        h1 = jax.nn.gelu(y2 @ blk["fc1_w"] + blk["fc1_b"])
        tok = tok + (h1 @ blk["fc2_w"] + blk["fc2_b"])

    return outputs


# ----------------------------------------------------------------------------
if __name__ == "__main__":
    key = jax.random.PRNGKey(0)
    k_param, k_x = jax.random.split(key)

    B, C, Himg, Wimg = 2, 4, 16, 16
    embed_dim, num_heads, depth, patch = 32, 4, 2, 4

    x = jax.random.normal(k_x, (B, C, Himg, Wimg), jnp.float32)
    params = init_params(k_param, C, embed_dim, num_heads, depth, patch)

    fwd = jax.jit(lambda p, xx: attention_extract_forward(p, xx, num_heads))
    out = fwd(params, x)
    out = jax.block_until_ready(out)

    # basic sanity: softmax rows of each extracted map sum to ~1 (exact
    # division in-kernel -> tight tolerance), finite, correct shape.
    for name, attn in out.items():
        assert attn.shape == (B, num_heads, 16, 16), (name, attn.shape)
        row_sums = jnp.sum(attn, axis=-1)
        assert jnp.allclose(row_sums, 1.0, atol=1e-5), name
        assert bool(jnp.all(jnp.isfinite(attn))), name

    print("KERNEL_OK")
</pallas_src>

<mosaic_0001>
module attributes {stable_mosaic.version = 11 : i64} {
  func.func @_attn_block_kernel(%arg0: i32, %arg1: memref<1x4x16x8xf32, #tpu.memory_space<vmem>>, %arg2: memref<1x4x16x8xf32, #tpu.memory_space<vmem>>, %arg3: memref<1x4x16x8xf32, #tpu.memory_space<vmem>>, %arg4: memref<4x8x32xf32, #tpu.memory_space<vmem>>, %arg5: memref<1x32xf32, #tpu.memory_space<vmem>>, %arg6: memref<1x4x256xf32, #tpu.memory_space<vmem>>, %arg7: memref<1x16x32xf32, #tpu.memory_space<vmem>>) attributes {dimension_semantics = [#tpu.dimension_semantics<parallel>], iteration_bounds = array<i64: 2>, scalar_prefetch = 0 : i64, scratch_operands = 0 : i64, tpu.core_type = #tpu.core_type<tc>, window_params = [{transform_indices = @transform_0, window_bounds = array<i64: 1, 4, 16, 8>}, {transform_indices = @transform_1, window_bounds = array<i64: 1, 4, 16, 8>}, {transform_indices = @transform_2, window_bounds = array<i64: 1, 4, 16, 8>}, {pipeline_mode = #tpu.pipeline_mode<synchronous>, transform_indices = @transform_3, window_bounds = array<i64: 4, 8, 32>}, {pipeline_mode = #tpu.pipeline_mode<synchronous>, transform_indices = @transform_4, window_bounds = array<i64: 1, 32>}, {transform_indices = @transform_5, window_bounds = array<i64: 1, 4, 256>}, {transform_indices = @transform_6, window_bounds = array<i64: 1, 16, 32>}]} {
    %c0 = arith.constant 0 : index
    %c0_0 = arith.constant 0 : index
    %c0_1 = arith.constant 0 : index
    %c0_2 = arith.constant 0 : index
    %0 = vector.load %arg1[%c0, %c0_0, %c0_1, %c0_2] : memref<1x4x16x8xf32, #tpu.memory_space<vmem>>, vector<1x4x16x8xf32>
    %1 = vector.shape_cast %0 : vector<1x4x16x8xf32> to vector<4x16x8xf32>
    %c0_3 = arith.constant 0 : index
    %c0_4 = arith.constant 0 : index
    %c0_5 = arith.constant 0 : index
    %c0_6 = arith.constant 0 : index
    %2 = vector.load %arg2[%c0_3, %c0_4, %c0_5, %c0_6] : memref<1x4x16x8xf32, #tpu.memory_space<vmem>>, vector<1x4x16x8xf32>
    %3 = vector.shape_cast %2 : vector<1x4x16x8xf32> to vector<4x16x8xf32>
    %c0_7 = arith.constant 0 : index
    %c0_8 = arith.constant 0 : index
    %c0_9 = arith.constant 0 : index
    %c0_10 = arith.constant 0 : index
    %4 = vector.load %arg3[%c0_7, %c0_8, %c0_9, %c0_10] : memref<1x4x16x8xf32, #tpu.memory_space<vmem>>, vector<1x4x16x8xf32>
    %5 = vector.shape_cast %4 : vector<1x4x16x8xf32> to vector<4x16x8xf32>
    %cst = arith.constant 0.353553385 : f32
    %6 = vector.broadcast %cst : f32 to vector<4x16x8xf32>
    %7 = arith.mulf %1, %6 : vector<4x16x8xf32>
    "tpu.trace_start"() <{level = 10 : i32, message = "hqd,hkd->hqk"}> : () -> ()
    %cst_11 = arith.constant dense<0.000000e+00> : vector<4x16x16xf32>
    %8 = tpu.matmul %7, %3, %cst_11 {dimension_numbers = #tpu.dot_dimension_numbers<[2], [2], [1], [1], [0, 0, 0, 1, 1, 1], [0], [0]>} : vector<4x16x8xf32>, vector<4x16x8xf32>, vector<4x16x16xf32> -> vector<4x16x16xf32>
    "tpu.trace_stop"() : () -> ()
    %cst_12 = arith.constant dense<0xFF800000> : vector<4x16xf32>
    %9 = vector.multi_reduction <maximumf>, %8, %cst_12 [2] : vector<4x16x16xf32> to vector<4x16xf32>
    %10 = vector.shape_cast %9 : vector<4x16xf32> to vector<4x16x1xf32>
    %11 = vector.broadcast %10 : vector<4x16x1xf32> to vector<4x16x16xf32>
    %12 = arith.subf %8, %11 : vector<4x16x16xf32>
    %13 = math.exp %12 : vector<4x16x16xf32>
    %cst_13 = arith.constant dense<0.000000e+00> : vector<4x16xf32>
    %14 = vector.multi_reduction <add>, %13, %cst_13 [2] : vector<4x16x16xf32> to vector<4x16xf32>
    %15 = vector.shape_cast %14 : vector<4x16xf32> to vector<4x16x1xf32>
    %16 = vector.broadcast %15 : vector<4x16x1xf32> to vector<4x16x16xf32>
    %17 = arith.divf %13, %16 : vector<4x16x16xf32>
    %18 = vector.shape_cast %17 : vector<4x16x16xf32> to vector<4x256xf32>
    %c0_14 = arith.constant 0 : index
    %c0_15 = arith.constant 0 : index
    %c0_16 = arith.constant 0 : index
    %19 = vector.load %arg6[%c0_14, %c0_15, %c0_16] : memref<1x4x256xf32, #tpu.memory_space<vmem>>, vector<1x4x256xf32>
    %20 = vector.shape_cast %19 : vector<1x4x256xf32> to vector<4x256xf32>
    %21 = vector.shape_cast %18 : vector<4x256xf32> to vector<1x4x256xf32>
    tpu.vector_store %arg6[%c0_14, %c0_15, %c0_16], %21 {strides = array<i32>} : memref<1x4x256xf32, #tpu.memory_space<vmem>>, vector<1x4x256xf32>,
    "tpu.trace_start"() <{level = 10 : i32, message = "hqk,hkd->hqd"}> : () -> ()
    %cst_17 = arith.constant dense<0.000000e+00> : vector<4x16x8xf32>
    %22 = tpu.matmul %17, %5, %cst_17 {dimension_numbers = #tpu.dot_dimension_numbers<[2], [1], [1], [2], [0, 0, 0, 1, 1, 2], [0], [0]>} : vector<4x16x16xf32>, vector<4x16x8xf32>, vector<4x16x8xf32> -> vector<4x16x8xf32>
    "tpu.trace_stop"() : () -> ()
    %c0_18 = arith.constant 0 : index
    %c0_19 = arith.constant 0 : index
    %c0_20 = arith.constant 0 : index
    %23 = vector.load %arg4[%c0_18, %c0_19, %c0_20] : memref<4x8x32xf32, #tpu.memory_space<vmem>>, vector<4x8x32xf32>
    %cst_21 = arith.constant 0.000000e+00 : f32
    %24 = vector.broadcast %cst_21 : f32 to vector<16x32xf32>
    %25 = vector.extract_strided_slice %22 {offsets = [0, 0, 0], sizes = [1, 16, 8], strides = [1, 1, 1]} : vector<4x16x8xf32> to vector<1x16x8xf32>
    %26 = vector.shape_cast %25 : vector<1x16x8xf32> to vector<16x8xf32>
    %27 = vector.extract_strided_slice %23 {offsets = [0, 0, 0], sizes = [1, 8, 32], strides = [1, 1, 1]} : vector<4x8x32xf32> to vector<1x8x32xf32>
    %28 = vector.shape_cast %27 : vector<1x8x32xf32> to vector<8x32xf32>
    %cst_22 = arith.constant dense<0.000000e+00> : vector<16x32xf32>
    %29 = tpu.matmul %26, %28, %cst_22 {dimension_numbers = #tpu.dot_dimension_numbers<[1], [0], [0], [1], [0, 0, 1, 1], [], []>} : vector<16x8xf32>, vector<8x32xf32>, vector<16x32xf32> -> vector<16x32xf32>
    %30 = arith.addf %24, %29 : vector<16x32xf32>
    %31 = vector.extract_strided_slice %22 {offsets = [1, 0, 0], sizes = [1, 16, 8], strides = [1, 1, 1]} : vector<4x16x8xf32> to vector<1x16x8xf32>
    %32 = vector.shape_cast %31 : vector<1x16x8xf32> to vector<16x8xf32>
    %33 = vector.extract_strided_slice %23 {offsets = [1, 0, 0], sizes = [1, 8, 32], strides = [1, 1, 1]} : vector<4x8x32xf32> to vector<1x8x32xf32>
    %34 = vector.shape_cast %33 : vector<1x8x32xf32> to vector<8x32xf32>
    %cst_23 = arith.constant dense<0.000000e+00> : vector<16x32xf32>
    %35 = tpu.matmul %32, %34, %cst_23 {dimension_numbers = #tpu.dot_dimension_numbers<[1], [0], [0], [1], [0, 0, 1, 1], [], []>} : vector<16x8xf32>, vector<8x32xf32>, vector<16x32xf32> -> vector<16x32xf32>
    %36 = arith.addf %30, %35 : vector<16x32xf32>
    %37 = vector.extract_strided_slice %22 {offsets = [2, 0, 0], sizes = [1, 16, 8], strides = [1, 1, 1]} : vector<4x16x8xf32> to vector<1x16x8xf32>
    %38 = vector.shape_cast %37 : vector<1x16x8xf32> to vector<16x8xf32>
    %39 = vector.extract_strided_slice %23 {offsets = [2, 0, 0], sizes = [1, 8, 32], strides = [1, 1, 1]} : vector<4x8x32xf32> to vector<1x8x32xf32>
    %40 = vector.shape_cast %39 : vector<1x8x32xf32> to vector<8x32xf32>
    %cst_24 = arith.constant dense<0.000000e+00> : vector<16x32xf32>
    %41 = tpu.matmul %38, %40, %cst_24 {dimension_numbers = #tpu.dot_dimension_numbers<[1], [0], [0], [1], [0, 0, 1, 1], [], []>} : vector<16x8xf32>, vector<8x32xf32>, vector<16x32xf32> -> vector<16x32xf32>
    %42 = arith.addf %36, %41 : vector<16x32xf32>
    %43 = vector.extract_strided_slice %22 {offsets = [3, 0, 0], sizes = [1, 16, 8], strides = [1, 1, 1]} : vector<4x16x8xf32> to vector<1x16x8xf32>
    %44 = vector.shape_cast %43 : vector<1x16x8xf32> to vector<16x8xf32>
    %45 = vector.extract_strided_slice %23 {offsets = [3, 0, 0], sizes = [1, 8, 32], strides = [1, 1, 1]} : vector<4x8x32xf32> to vector<1x8x32xf32>
    %46 = vector.shape_cast %45 : vector<1x8x32xf32> to vector<8x32xf32>
    %cst_25 = arith.constant dense<0.000000e+00> : vector<16x32xf32>
    %47 = tpu.matmul %44, %46, %cst_25 {dimension_numbers = #tpu.dot_dimension_numbers<[1], [0], [0], [1], [0, 0, 1, 1], [], []>} : vector<16x8xf32>, vector<8x32xf32>, vector<16x32xf32> -> vector<16x32xf32>
    %48 = arith.addf %42, %47 : vector<16x32xf32>
    %c0_26 = arith.constant 0 : index
    %c0_27 = arith.constant 0 : index
    %49 = vector.load %arg5[%c0_26, %c0_27] : memref<1x32xf32, #tpu.memory_space<vmem>>, vector<1x32xf32>
    %50 = vector.broadcast %49 : vector<1x32xf32> to vector<16x32xf32>
    %51 = arith.addf %48, %50 : vector<16x32xf32>
    %c0_28 = arith.constant 0 : index
    %c0_29 = arith.constant 0 : index
    %c0_30 = arith.constant 0 : index
    %52 = vector.load %arg7[%c0_28, %c0_29, %c0_30] : memref<1x16x32xf32, #tpu.memory_space<vmem>>, vector<1x16x32xf32>
    %53 = vector.shape_cast %52 : vector<1x16x32xf32> to vector<16x32xf32>
    %54 = vector.shape_cast %51 : vector<16x32xf32> to vector<1x16x32xf32>
    tpu.vector_store %arg7[%c0_28, %c0_29, %c0_30], %54 {strides = array<i32>} : memref<1x16x32xf32, #tpu.memory_space<vmem>>, vector<1x16x32xf32>,
    return
  }
  func.func @transform_0(%arg0: i32) -> (i32, i32, i32, i32) {
    %c0_i32 = arith.constant 0 : i32
    %c0_i32_0 = arith.constant 0 : i32
    %c0_i32_1 = arith.constant 0 : i32
    %c0_i32_2 = arith.constant 0 : i32
    return %arg0, %c0_i32, %c0_i32_0, %c0_i32_1 : i32, i32, i32, i32
  }
  func.func @transform_1(%arg0: i32) -> (i32, i32, i32, i32) {
    %c0_i32 = arith.constant 0 : i32
    %c0_i32_0 = arith.constant 0 : i32
    %c0_i32_1 = arith.constant 0 : i32
    %c0_i32_2 = arith.constant 0 : i32
    return %arg0, %c0_i32, %c0_i32_0, %c0_i32_1 : i32, i32, i32, i32
  }
  func.func @transform_2(%arg0: i32) -> (i32, i32, i32, i32) {
    %c0_i32 = arith.constant 0 : i32
    %c0_i32_0 = arith.constant 0 : i32
    %c0_i32_1 = arith.constant 0 : i32
    %c0_i32_2 = arith.constant 0 : i32
    return %arg0, %c0_i32, %c0_i32_0, %c0_i32_1 : i32, i32, i32, i32
  }
  func.func @transform_3(%arg0: i32) -> (i32, i32, i32) {
    %c0_i32 = arith.constant 0 : i32
    %c0_i32_0 = arith.constant 0 : i32
    %c0_i32_1 = arith.constant 0 : i32
    %c0_i32_2 = arith.constant 0 : i32
    return %c0_i32, %c0_i32_0, %c0_i32_1 : i32, i32, i32
  }
  func.func @transform_4(%arg0: i32) -> (i32, i32) {
    %c0_i32 = arith.constant 0 : i32
    %c0_i32_0 = arith.constant 0 : i32
    %c0_i32_1 = arith.constant 0 : i32
    return %c0_i32, %c0_i32_0 : i32, i32
  }
  func.func @transform_5(%arg0: i32) -> (i32, i32, i32) {
    %c0_i32 = arith.constant 0 : i32
    %c0_i32_0 = arith.constant 0 : i32
    %c0_i32_1 = arith.constant 0 : i32
    return %arg0, %c0_i32, %c0_i32_0 : i32, i32, i32
  }
  func.func @transform_6(%arg0: i32) -> (i32, i32, i32) {
    %c0_i32 = arith.constant 0 : i32
    %c0_i32_0 = arith.constant 0 : i32
    %c0_i32_1 = arith.constant 0 : i32
    return %arg0, %c0_i32, %c0_i32_0 : i32, i32, i32
  }
}

module attributes {stable_mosaic.version = 11 : i64} {
  func.func @_attn_block_kernel(%arg0: i32, %arg1: memref<1x4x16x8xf32, #tpu.memory_space<vmem>>, %arg2: memref<1x4x16x8xf32, #tpu.memory_space<vmem>>, %arg3: memref<1x4x16x8xf32, #tpu.memory_space<vmem>>, %arg4: memref<4x8x32xf32, #tpu.memory_space<vmem>>, %arg5: memref<1x32xf32, #tpu.memory_space<vmem>>, %arg6: memref<1x4x256xf32, #tpu.memory_space<vmem>>, %arg7: memref<1x16x32xf32, #tpu.memory_space<vmem>>) attributes {dimension_semantics = [#tpu.dimension_semantics<parallel>], iteration_bounds = array<i64: 2>, scalar_prefetch = 0 : i64, scratch_operands = 0 : i64, tpu.core_type = #tpu.core_type<tc>, window_params = [{transform_indices = @transform_0, window_bounds = array<i64: 1, 4, 16, 8>}, {transform_indices = @transform_1, window_bounds = array<i64: 1, 4, 16, 8>}, {transform_indices = @transform_2, window_bounds = array<i64: 1, 4, 16, 8>}, {pipeline_mode = #tpu.pipeline_mode<synchronous>, transform_indices = @transform_3, window_bounds = array<i64: 4, 8, 32>}, {pipeline_mode = #tpu.pipeline_mode<synchronous>, transform_indices = @transform_4, window_bounds = array<i64: 1, 32>}, {transform_indices = @transform_5, window_bounds = array<i64: 1, 4, 256>}, {transform_indices = @transform_6, window_bounds = array<i64: 1, 16, 32>}]} {
    %c0 = arith.constant 0 : index
    %c0_0 = arith.constant 0 : index
    %c0_1 = arith.constant 0 : index
    %c0_2 = arith.constant 0 : index
    %0 = vector.load %arg1[%c0, %c0_0, %c0_1, %c0_2] : memref<1x4x16x8xf32, #tpu.memory_space<vmem>>, vector<1x4x16x8xf32>
    %1 = vector.shape_cast %0 : vector<1x4x16x8xf32> to vector<4x16x8xf32>
    %c0_3 = arith.constant 0 : index
    %c0_4 = arith.constant 0 : index
    %c0_5 = arith.constant 0 : index
    %c0_6 = arith.constant 0 : index
    %2 = vector.load %arg2[%c0_3, %c0_4, %c0_5, %c0_6] : memref<1x4x16x8xf32, #tpu.memory_space<vmem>>, vector<1x4x16x8xf32>
    %3 = vector.shape_cast %2 : vector<1x4x16x8xf32> to vector<4x16x8xf32>
    %c0_7 = arith.constant 0 : index
    %c0_8 = arith.constant 0 : index
    %c0_9 = arith.constant 0 : index
    %c0_10 = arith.constant 0 : index
    %4 = vector.load %arg3[%c0_7, %c0_8, %c0_9, %c0_10] : memref<1x4x16x8xf32, #tpu.memory_space<vmem>>, vector<1x4x16x8xf32>
    %5 = vector.shape_cast %4 : vector<1x4x16x8xf32> to vector<4x16x8xf32>
    %cst = arith.constant 0.353553385 : f32
    %6 = vector.broadcast %cst : f32 to vector<4x16x8xf32>
    %7 = arith.mulf %1, %6 : vector<4x16x8xf32>
    "tpu.trace_start"() <{level = 10 : i32, message = "hqd,hkd->hqk"}> : () -> ()
    %cst_11 = arith.constant dense<0.000000e+00> : vector<4x16x16xf32>
    %8 = tpu.matmul %7, %3, %cst_11 {dimension_numbers = #tpu.dot_dimension_numbers<[2], [2], [1], [1], [0, 0, 0, 1, 1, 1], [0], [0]>} : vector<4x16x8xf32>, vector<4x16x8xf32>, vector<4x16x16xf32> -> vector<4x16x16xf32>
    "tpu.trace_stop"() : () -> ()
    %cst_12 = arith.constant dense<0xFF800000> : vector<4x16xf32>
    %9 = vector.multi_reduction <maximumf>, %8, %cst_12 [2] : vector<4x16x16xf32> to vector<4x16xf32>
    %10 = vector.shape_cast %9 : vector<4x16xf32> to vector<4x16x1xf32>
    %11 = vector.broadcast %10 : vector<4x16x1xf32> to vector<4x16x16xf32>
    %12 = arith.subf %8, %11 : vector<4x16x16xf32>
    %13 = math.exp %12 : vector<4x16x16xf32>
    %cst_13 = arith.constant dense<0.000000e+00> : vector<4x16xf32>
    %14 = vector.multi_reduction <add>, %13, %cst_13 [2] : vector<4x16x16xf32> to vector<4x16xf32>
    %15 = vector.shape_cast %14 : vector<4x16xf32> to vector<4x16x1xf32>
    %16 = vector.broadcast %15 : vector<4x16x1xf32> to vector<4x16x16xf32>
    %17 = arith.divf %13, %16 : vector<4x16x16xf32>
    %18 = vector.shape_cast %17 : vector<4x16x16xf32> to vector<4x256xf32>
    %c0_14 = arith.constant 0 : index
    %c0_15 = arith.constant 0 : index
    %c0_16 = arith.constant 0 : index
    %19 = vector.load %arg6[%c0_14, %c0_15, %c0_16] : memref<1x4x256xf32, #tpu.memory_space<vmem>>, vector<1x4x256xf32>
    %20 = vector.shape_cast %19 : vector<1x4x256xf32> to vector<4x256xf32>
    %21 = vector.shape_cast %18 : vector<4x256xf32> to vector<1x4x256xf32>
    tpu.vector_store %arg6[%c0_14, %c0_15, %c0_16], %21 {strides = array<i32>} : memref<1x4x256xf32, #tpu.memory_space<vmem>>, vector<1x4x256xf32>,
    "tpu.trace_start"() <{level = 10 : i32, message = "hqk,hkd->hqd"}> : () -> ()
    %cst_17 = arith.constant dense<0.000000e+00> : vector<4x16x8xf32>
    %22 = tpu.matmul %17, %5, %cst_17 {dimension_numbers = #tpu.dot_dimension_numbers<[2], [1], [1], [2], [0, 0, 0, 1, 1, 2], [0], [0]>} : vector<4x16x16xf32>, vector<4x16x8xf32>, vector<4x16x8xf32> -> vector<4x16x8xf32>
    "tpu.trace_stop"() : () -> ()
    %c0_18 = arith.constant 0 : index
    %c0_19 = arith.constant 0 : index
    %c0_20 = arith.constant 0 : index
    %23 = vector.load %arg4[%c0_18, %c0_19, %c0_20] : memref<4x8x32xf32, #tpu.memory_space<vmem>>, vector<4x8x32xf32>
    %cst_21 = arith.constant 0.000000e+00 : f32
    %24 = vector.broadcast %cst_21 : f32 to vector<16x32xf32>
    %25 = vector.extract_strided_slice %22 {offsets = [0, 0, 0], sizes = [1, 16, 8], strides = [1, 1, 1]} : vector<4x16x8xf32> to vector<1x16x8xf32>
    %26 = vector.shape_cast %25 : vector<1x16x8xf32> to vector<16x8xf32>
    %27 = vector.extract_strided_slice %23 {offsets = [0, 0, 0], sizes = [1, 8, 32], strides = [1, 1, 1]} : vector<4x8x32xf32> to vector<1x8x32xf32>
    %28 = vector.shape_cast %27 : vector<1x8x32xf32> to vector<8x32xf32>
    %cst_22 = arith.constant dense<0.000000e+00> : vector<16x32xf32>
    %29 = tpu.matmul %26, %28, %cst_22 {dimension_numbers = #tpu.dot_dimension_numbers<[1], [0], [0], [1], [0, 0, 1, 1], [], []>} : vector<16x8xf32>, vector<8x32xf32>, vector<16x32xf32> -> vector<16x32xf32>
    %30 = arith.addf %24, %29 : vector<16x32xf32>
    %31 = vector.extract_strided_slice %22 {offsets = [1, 0, 0], sizes = [1, 16, 8], strides = [1, 1, 1]} : vector<4x16x8xf32> to vector<1x16x8xf32>
    %32 = vector.shape_cast %31 : vector<1x16x8xf32> to vector<16x8xf32>
    %33 = vector.extract_strided_slice %23 {offsets = [1, 0, 0], sizes = [1, 8, 32], strides = [1, 1, 1]} : vector<4x8x32xf32> to vector<1x8x32xf32>
    %34 = vector.shape_cast %33 : vector<1x8x32xf32> to vector<8x32xf32>
    %cst_23 = arith.constant dense<0.000000e+00> : vector<16x32xf32>
    %35 = tpu.matmul %32, %34, %cst_23 {dimension_numbers = #tpu.dot_dimension_numbers<[1], [0], [0], [1], [0, 0, 1, 1], [], []>} : vector<16x8xf32>, vector<8x32xf32>, vector<16x32xf32> -> vector<16x32xf32>
    %36 = arith.addf %30, %35 : vector<16x32xf32>
    %37 = vector.extract_strided_slice %22 {offsets = [2, 0, 0], sizes = [1, 16, 8], strides = [1, 1, 1]} : vector<4x16x8xf32> to vector<1x16x8xf32>
    %38 = vector.shape_cast %37 : vector<1x16x8xf32> to vector<16x8xf32>
    %39 = vector.extract_strided_slice %23 {offsets = [2, 0, 0], sizes = [1, 8, 32], strides = [1, 1, 1]} : vector<4x8x32xf32> to vector<1x8x32xf32>
    %40 = vector.shape_cast %39 : vector<1x8x32xf32> to vector<8x32xf32>
    %cst_24 = arith.constant dense<0.000000e+00> : vector<16x32xf32>
    %41 = tpu.matmul %38, %40, %cst_24 {dimension_numbers = #tpu.dot_dimension_numbers<[1], [0], [0], [1], [0, 0, 1, 1], [], []>} : vector<16x8xf32>, vector<8x32xf32>, vector<16x32xf32> -> vector<16x32xf32>
    %42 = arith.addf %36, %41 : vector<16x32xf32>
    %43 = vector.extract_strided_slice %22 {offsets = [3, 0, 0], sizes = [1, 16, 8], strides = [1, 1, 1]} : vector<4x16x8xf32> to vector<1x16x8xf32>
    %44 = vector.shape_cast %43 : vector<1x16x8xf32> to vector<16x8xf32>
    %45 = vector.extract_strided_slice %23 {offsets = [3, 0, 0], sizes = [1, 8, 32], strides = [1, 1, 1]} : vector<4x8x32xf32> to vector<1x8x32xf32>
    %46 = vector.shape_cast %45 : vector<1x8x32xf32> to vector<8x32xf32>
    %cst_25 = arith.constant dense<0.000000e+00> : vector<16x32xf32>
    %47 = tpu.matmul %44, %46, %cst_25 {dimension_numbers = #tpu.dot_dimension_numbers<[1], [0], [0], [1], [0, 0, 1, 1], [], []>} : vector<16x8xf32>, vector<8x32xf32>, vector<16x32xf32> -> vector<16x32xf32>
    %48 = arith.addf %42, %47 : vector<16x32xf32>
    %c0_26 = arith.constant 0 : index
    %c0_27 = arith.constant 0 : index
    %49 = vector.load %arg5[%c0_26, %c0_27] : memref<1x32xf32, #tpu.memory_space<vmem>>, vector<1x32xf32>
    %50 = vector.broadcast %49 : vector<1x32xf32> to vector<16x32xf32>
    %51 = arith.addf %48, %50 : vector<16x32xf32>
    %c0_28 = arith.constant 0 : index
    %c0_29 = arith.constant 0 : index
    %c0_30 = arith.constant 0 : index
    %52 = vector.load %arg7[%c0_28, %c0_29, %c0_30] : memref<1x16x32xf32, #tpu.memory_space<vmem>>, vector<1x16x32xf32>
    %53 = vector.shape_cast %52 : vector<1x16x32xf32> to vector<16x32xf32>
    %54 = vector.shape_cast %51 : vector<16x32xf32> to vector<1x16x32xf32>
    tpu.vector_store %arg7[%c0_28, %c0_29, %c0_30], %54 {strides = array<i32>} : memref<1x16x32xf32, #tpu.memory_space<vmem>>, vector<1x16x32xf32>,
    return
  }
  func.func @transform_0(%arg0: i32) -> (i32, i32, i32, i32) {
    %c0_i32 = arith.constant 0 : i32
    %c0_i32_0 = arith.constant 0 : i32
    %c0_i32_1 = arith.constant 0 : i32
    %c0_i32_2 = arith.constant 0 : i32
    return %arg0, %c0_i32, %c0_i32_0, %c0_i32_1 : i32, i32, i32, i32
  }
  func.func @transform_1(%arg0: i32) -> (i32, i32, i32, i32) {
    %c0_i32 = arith.constant 0 : i32
    %c0_i32_0 = arith.constant 0 : i32
    %c0_i32_1 = arith.constant 0 : i32
    %c0_i32_2 = arith.constant 0 : i32
    return %arg0, %c0_i32, %c0_i32_0, %c0_i32_1 : i32, i32, i32, i32
  }
  func.func @transform_2(%arg0: i32) -> (i32, i32, i32, i32) {
    %c0_i32 = arith.constant 0 : i32
    %c0_i32_0 = arith.constant 0 : i32
    %c0_i32_1 = arith.constant 0 : i32
    %c0_i32_2 = arith.constant 0 : i32
    return %arg0, %c0_i32, %c0_i32_0, %c0_i32_1 : i32, i32, i32, i32
  }
  func.func @transform_3(%arg0: i32) -> (i32, i32, i32) {
    %c0_i32 = arith.constant 0 : i32
    %c0_i32_0 = arith.constant 0 : i32
    %c0_i32_1 = arith.constant 0 : i32
    %c0_i32_2 = arith.constant 0 : i32
    return %c0_i32, %c0_i32_0, %c0_i32_1 : i32, i32, i32
  }
  func.func @transform_4(%arg0: i32) -> (i32, i32) {
    %c0_i32 = arith.constant 0 : i32
    %c0_i32_0 = arith.constant 0 : i32
    %c0_i32_1 = arith.constant 0 : i32
    return %c0_i32, %c0_i32_0 : i32, i32
  }
  func.func @transform_5(%arg0: i32) -> (i32, i32, i32) {
    %c0_i32 = arith.constant 0 : i32
    %c0_i32_0 = arith.constant 0 : i32
    %c0_i32_1 = arith.constant 0 : i32
    return %arg0, %c0_i32, %c0_i32_0 : i32, i32, i32
  }
  func.func @transform_6(%arg0: i32) -> (i32, i32, i32) {
    %c0_i32 = arith.constant 0 : i32
    %c0_i32_0 = arith.constant 0 : i32
    %c0_i32_1 = arith.constant 0 : i32
    return %arg0, %c0_i32, %c0_i32_0 : i32, i32, i32
  }
}

</mosaic_0001>

<llo_original>
// kernel: _lambda_.3
$region0: #{_lambda_.3}
  #allocation0 [shape = 'u32[]', space=smem, size = 0x4, offset = 0x4, fixed_abs, tag = 'smem constant byte address 0x4 - core index']
  #allocation1 [shape = 'u32[72,128]{1,0:T(1,128)}', space=vmem, size = 0x9000, scoped, tag = 'internal scratch']
  %s0 = inlined_call_operand.vmem [shape: f32[2,4,16,8], index: 0, kind: input, shape index: {}]
  %s1 = inlined_call_operand.vmem [shape: f32[2,4,16,8], index: 1, kind: input, shape index: {}]
  %s2 = inlined_call_operand.vmem [shape: f32[2,4,16,8], index: 2, kind: input, shape index: {}]
  %s3 = inlined_call_operand.vmem [shape: f32[4,8,32], index: 3, kind: input, shape index: {}]
  %s4 = inlined_call_operand.vmem [shape: f32[1,32], index: 4, kind: input, shape index: {}]
  %s5 = inlined_call_operand.vmem [shape: f32[2,4,256], index: 5, kind: output, shape index: {0}]
  %s6 = inlined_call_operand.hbm [shape: f32[2,16,32], index: 6, kind: output, shape index: {1}]
  %7 = xla_tuple %s5, %s6
  %s8 = sld [smem:[#allocation0]]
  $region61: #{_lambda_.3} parent=0
    _
  %s10 = ssub.s32 1, %s8
  %s11 = scalar_select 0, %s10, %s8
  $region1: #{_lambda_.3} parent=0
    #allocation2 [shape = 'u8[16384]{0}', space=vmem, size = 0x4000, scoped, tag = 'output window, operand 1']
    #allocation3 [shape = 's32[2]{0}', space=sflag, size = 0x8, scoped, tag = 'scoped memory for _lambda_.3']
    %12 = vsyncpa [#allocation3], 0
    %s13 = scalar_lea.sflag [#allocation3], 1
    %14 = vsyncpa %s13, 0
    loop: start=0, step=1, limit=4
    $region2: #{_lambda_.3} parent=1 // loop_pre_header
      _
    $region3: #{_lambda_.3} parent=1 // loop_header
      %s16 = sphi 0, %s20
      %p17 = scmp.ge.s32.totalorder %s16, 4
      %s26 = sphi 0, %s28
      %s29 = sphi 0, %s26
      %s30 = sphi 0, %s29
      %s46 = sphi 0, %s30
      %s52 = sphi 0, %s54
      %s55 = sphi 0, %s52
      %s56 = sphi 0, %s55
      %s72 = sphi 0, %s56
      %s78 = sphi 0, %s80
      %s81 = sphi 0, %s78
      %s82 = sphi 0, %s81
      %s98 = sphi 0, %s82
      %s102 = sphi 0, %s102
      %s104 = sphi 0, %s102
      %s105 = sphi 0, %s104
      %s119 = sphi 0, %s105
      %s123 = sphi 0, %s123
      %s125 = sphi 0, %s123
      %s126 = sphi 0, %s125
      %s140 = sphi 0, %s126
      %s146 = sphi 0, %s148
      %s149 = sphi 0, %s146
      %s150 = sphi 0, %s149
      %s166 = sphi 0, %s150
      %s172 = sphi 0, %s174
      %s175 = sphi 0, %s172
      %s176 = sphi 0, %s175
      %s192 = sphi 0, %s176
    $region4: #{_lambda_.3} parent=1 // loop_header_branch
      %19 = sbr.rel (%p17) target = $region8
    $region5: #{_lambda_.3} parent=1 // loop_body
      %s21 = ssub.s32 %s16, 1
      %s22 = ssub.s32 %s16, 2
      %s23 = sadd.s32 %s16, 1
      %s24 = ssub.s32 %s16, %s23
      %p25 = scmp.eq.s32.totalorder %s24, 0
      %s27 = sadd.s32 %s26, 1
      %s28 = scalar_select %p25, %s26, %s27
      %p31 = pneg %p25
      %p32 = scmp.eq.s32.totalorder %s16, 1
      %p33 = por %p31, %p32
      %p34 = scmp.ne.s32.totalorder %s26, %s29
      %p35 = scmp.eq.s32.totalorder %s16, 0
      %p36 = por %p34, %p35
      %p37 = scmp.ne.s32.totalorder %s26, %s29
      %p38 = scmp.eq.s32.totalorder %s21, 1
      %p39 = por %p37, %p38
      %p40 = scmp.ne.s32.totalorder %s29, %s30
      %p41 = scmp.eq.s32.totalorder %s21, 0
      %p42 = por %p40, %p41
      %p43 = scmp.ne.s32.totalorder %s29, %s30
      %p44 = scmp.eq.s32.totalorder %s22, 1
      %p45 = por %p43, %p44
      %p47 = scmp.ne.s32.totalorder %s30, %s46
      %p48 = scmp.eq.s32.totalorder %s22, 0
      %p49 = por %p47, %p48
      %s50 = ssub.s32 %s16, %s23
      %p51 = scmp.eq.s32.totalorder %s50, 0
      %s53 = sadd.s32 %s52, 1
      %s54 = scalar_select %p51, %s52, %s53
      %p57 = pneg %p51
      %p58 = scmp.eq.s32.totalorder %s16, 1
      %p59 = por %p57, %p58
      %p60 = scmp.ne.s32.totalorder %s52, %s55
      %p61 = scmp.eq.s32.totalorder %s16, 0
      %p62 = por %p60, %p61
      %p63 = scmp.ne.s32.totalorder %s52, %s55
      %p64 = scmp.eq.s32.totalorder %s21, 1
      %p65 = por %p63, %p64
      %p66 = scmp.ne.s32.totalorder %s55, %s56
      %p67 = scmp.eq.s32.totalorder %s21, 0
      %p68 = por %p66, %p67
      %p69 = scmp.ne.s32.totalorder %s55, %s56
      %p70 = scmp.eq.s32.totalorder %s22, 1
      %p71 = por %p69, %p70
      %p73 = scmp.ne.s32.totalorder %s56, %s72
      %p74 = scmp.eq.s32.totalorder %s22, 0
      %p75 = por %p73, %p74
      %s76 = ssub.s32 %s16, %s23
      %p77 = scmp.eq.s32.totalorder %s76, 0
      %s79 = sadd.s32 %s78, 1
      %s80 = scalar_select %p77, %s78, %s79
      %p83 = pneg %p77
      %p84 = scmp.eq.s32.totalorder %s16, 1
      %p85 = por %p83, %p84
      %p86 = scmp.ne.s32.totalorder %s78, %s81
      %p87 = scmp.eq.s32.totalorder %s16, 0
      %p88 = por %p86, %p87
      %p89 = scmp.ne.s32.totalorder %s78, %s81
      %p90 = scmp.eq.s32.totalorder %s21, 1
      %p91 = por %p89, %p90
      %p92 = scmp.ne.s32.totalorder %s81, %s82
      %p93 = scmp.eq.s32.totalorder %s21, 0
      %p94 = por %p92, %p93
      %p95 = scmp.ne.s32.totalorder %s81, %s82
      %p96 = scmp.eq.s32.totalorder %s22, 1
      %p97 = por %p95, %p96
      %p99 = scmp.ne.s32.totalorder %s82, %s98
      %p100 = scmp.eq.s32.totalorder %s22, 0
      %p101 = por %p99, %p100
      %s103 = sadd.s32 %s102, 1
      %p106 = scmp.eq.s32.totalorder %s16, 1
      %p107 = scmp.ne.s32.totalorder %s102, %s104
      %p108 = scmp.eq.s32.totalorder %s16, 0
      %p109 = por %p107, %p108
      %p110 = scmp.ne.s32.totalorder %s102, %s104
      %p111 = scmp.eq.s32.totalorder %s21, 1
      %p112 = por %p110, %p111
      %p113 = scmp.ne.s32.totalorder %s104, %s105
      %p114 = scmp.eq.s32.totalorder %s21, 0
      %p115 = por %p113, %p114
      %p116 = scmp.ne.s32.totalorder %s104, %s105
      %p117 = scmp.eq.s32.totalorder %s22, 1
      %p118 = por %p116, %p117
      %p120 = scmp.ne.s32.totalorder %s105, %s119
      %p121 = scmp.eq.s32.totalorder %s22, 0
      %p122 = por %p120, %p121
      %s124 = sadd.s32 %s123, 1
      %p127 = scmp.eq.s32.totalorder %s16, 1
      %p128 = scmp.ne.s32.totalorder %s123, %s125
      %p129 = scmp.eq.s32.totalorder %s16, 0
      %p130 = por %p128, %p129
      %p131 = scmp.ne.s32.totalorder %s123, %s125
      %p132 = scmp.eq.s32.totalorder %s21, 1
      %p133 = por %p131, %p132
      %p134 = scmp.ne.s32.totalorder %s125, %s126
      %p135 = scmp.eq.s32.totalorder %s21, 0
      %p136 = por %p134, %p135
      %p137 = scmp.ne.s32.totalorder %s125, %s126
      %p138 = scmp.eq.s32.totalorder %s22, 1
      %p139 = por %p137, %p138
      %p141 = scmp.ne.s32.totalorder %s126, %s140
      %p142 = scmp.eq.s32.totalorder %s22, 0
      %p143 = por %p141, %p142
      %s144 = ssub.s32 %s16, %s23
      %p145 = scmp.eq.s32.totalorder %s144, 0
      %s147 = sadd.s32 %s146, 1
      %s148 = scalar_select %p145, %s146, %s147
      %p151 = pneg %p145
      %p152 = scmp.eq.s32.totalorder %s16, 1
      %p153 = por %p151, %p152
      %p154 = scmp.ne.s32.totalorder %s146, %s149
      %p155 = scmp.eq.s32.totalorder %s16, 0
      %p156 = por %p154, %p155
      %p157 = scmp.ne.s32.totalorder %s146, %s149
      %p158 = scmp.eq.s32.totalorder %s21, 1
      %p159 = por %p157, %p158
      %p160 = scmp.ne.s32.totalorder %s149, %s150
      %p161 = scmp.eq.s32.totalorder %s21, 0
      %p162 = por %p160, %p161
      %p163 = scmp.ne.s32.totalorder %s149, %s150
      %p164 = scmp.eq.s32.totalorder %s22, 1
      %p165 = por %p163, %p164
      %p167 = scmp.ne.s32.totalorder %s150, %s166
      %p168 = scmp.eq.s32.totalorder %s22, 0
      %p169 = por %p167, %p168
      %s170 = ssub.s32 %s16, %s23
      %p171 = scmp.eq.s32.totalorder %s170, 0
      %s173 = sadd.s32 %s172, 1
      %s174 = scalar_select %p171, %s172, %s173
      %p177 = pneg %p171
      %p178 = scmp.eq.s32.totalorder %s16, 1
      %p179 = por %p177, %p178
      %p180 = scmp.ne.s32.totalorder %s172, %s175
      %p181 = scmp.eq.s32.totalorder %s16, 0
      %p182 = por %p180, %p181
      %p183 = scmp.ne.s32.totalorder %s172, %s175
      %p184 = scmp.eq.s32.totalorder %s21, 1
      %p185 = por %p183, %p184
      %p186 = scmp.ne.s32.totalorder %s175, %s176
      %p187 = scmp.eq.s32.totalorder %s21, 0
      %p188 = por %p186, %p187
      %p189 = scmp.ne.s32.totalorder %s175, %s176
      %p190 = scmp.eq.s32.totalorder %s22, 1
      %p191 = por %p189, %p190
      %p193 = scmp.ne.s32.totalorder %s176, %s192
      %p194 = scmp.eq.s32.totalorder %s22, 0
      %p195 = por %p193, %p194
      %p196 = scmp.le.s32.totalorder 1, %s16
      %p197 = scmp.lt.s32.totalorder %s16, 3
      %p198 = pnand %p196, %p197
      %p199 = pneg %p198
      // Predicated region
      $region9: #{_lambda_.3} parent=5 // pred_check
        _
      $region10: #{_lambda_.3} parent=5 // pred_check_branch
        %201 = sbr.rel (%p198) target = $region12
      $region11: #{_lambda_.3} parent=5 // pred_region
        %s202 = ssub.s32 %s16, 1
        // Predicated region
        $region13: #{_lambda_.3} parent=11 // pred_check
          %p203 = pneg %p115
        $region14: #{_lambda_.3} parent=11 // pred_check_branch
          %205 = sbr.rel (%p203) target = $region16
        $region15: #{_lambda_.3} parent=11 // pred_region
          _
        $region16: #{_lambda_.3} parent=11 // pred_fallthru
          _
        // Predicated region
        $region17: #{_lambda_.3} parent=11 // pred_check
          %p206 = pneg %p136
        $region18: #{_lambda_.3} parent=11 // pred_check_branch
          %208 = sbr.rel (%p206) target = $region20
        $region19: #{_lambda_.3} parent=11 // pred_region
          _
        $region20: #{_lambda_.3} parent=11 // pred_fallthru
          _
      $region12: #{_lambda_.3} parent=5 // pred_fallthru
        _
      %p209 = scmp.lt.s32.totalorder %s16, 2
      // Predicated region
      $region21: #{_lambda_.3} parent=5 // pred_check
        %p210 = pneg %p209
      $region22: #{_lambda_.3} parent=5 // pred_check_branch
        %212 = sbr.rel (%p210) target = $region24
      $region23: #{_lambda_.3} parent=5 // pred_region
        // Predicated region
        $region25: #{_lambda_.3} parent=23 // pred_check
          %p213 = pneg %p36
        $region26: #{_lambda_.3} parent=23 // pred_check_branch
          %215 = sbr.rel (%p213) target = $region28
        $region27: #{_lambda_.3} parent=23 // pred_region
          %p216 = scmp.lt.s32.totalorder %s16, 1
          %s217 = scalar_select %p216, %s16, 1
          %s218 = smul.addr %s217, 8
          %s219 = smul.addr %s218, 8
          %s220 = scalar_lea.vmem %s0, %s219
        $region28: #{_lambda_.3} parent=23 // pred_fallthru
          _
        // Predicated region
        $region29: #{_lambda_.3} parent=23 // pred_check
          %p221 = pneg %p62
        $region30: #{_lambda_.3} parent=23 // pred_check_branch
          %223 = sbr.rel (%p221) target = $region32
        $region31: #{_lambda_.3} parent=23 // pred_region
          %p224 = scmp.lt.s32.totalorder %s16, 1
          %s225 = scalar_select %p224, %s16, 1
          %s226 = smul.addr %s225, 8
          %s227 = smul.addr %s226, 8
          %s228 = scalar_lea.vmem %s1, %s227
        $region32: #{_lambda_.3} parent=23 // pred_fallthru
          _
        // Predicated region
        $region33: #{_lambda_.3} parent=23 // pred_check
          %p229 = pneg %p88
        $region34: #{_lambda_.3} parent=23 // pred_check_branch
          %231 = sbr.rel (%p229) target = $region36
        $region35: #{_lambda_.3} parent=23 // pred_region
          %p232 = scmp.lt.s32.totalorder %s16, 1
          %s233 = scalar_select %p232, %s16, 1
          %s234 = smul.addr %s233, 8
          %s235 = smul.addr %s234, 8
          %s236 = scalar_lea.vmem %s2, %s235
        $region36: #{_lambda_.3} parent=23 // pred_fallthru
          _
      $region24: #{_lambda_.3} parent=5 // pred_fallthru
        _
      %p237 = scmp.le.s32.totalorder 1, %s16
      %p238 = scmp.lt.s32.totalorder %s16, 3
      %p239 = pnand %p237, %p238
      %p240 = pneg %p239
      // Predicated region
      $region37: #{_lambda_.3} parent=5 // pred_check
        _
      $region38: #{_lambda_.3} parent=5 // pred_check_branch
        %242 = sbr.rel (%p239) target = $region40
      $region39: #{_lambda_.3} parent=5 // pred_region
        %s243 = ssub.s32 %s16, 1
        %p244 = scmp.lt.s32.totalorder %s21, 1
        %s245 = scalar_select %p244, %s21, 1
        %s246 = smul.addr %s245, 8
        %s247 = smul.addr %s246, 8
        %s248 = scalar_lea.vmem %s0, %s247
        %p249 = pneg %p42
        %p250 = pneg %p39
        %p251 = scmp.lt.s32.totalorder %s21, 1
        %s252 = scalar_select %p251, %s21, 1
        %s253 = smul.addr %s252, 8
        %s254 = smul.addr %s253, 8
        %s255 = scalar_lea.vmem %s1, %s254
        %p256 = pneg %p68
        %p257 = pneg %p65
        %p258 = scmp.lt.s32.totalorder %s21, 1
        %s259 = scalar_select %p258, %s21, 1
        %s260 = smul.addr %s259, 8
        %s261 = smul.addr %s260, 8
        %s262 = scalar_lea.vmem %s2, %s261
        %p263 = pneg %p94
        %p264 = pneg %p91
        %p265 = pneg %p115
        %p266 = pneg %p112
        %p267 = pneg %p136
        %p268 = pneg %p133
        %p269 = pneg %p162
        %p270 = pneg %p159
        %p271 = scmp.lt.s32.totalorder %s21, 1
        %s272 = scalar_select %p271, %s21, 1
        %s273 = smul.addr %s272, 2
        %s274 = smul.addr %s273, 4
        %s275 = scalar_lea.vmem %s5, %s274
        %p276 = pneg %p188
        %p277 = pneg %p185
        %s278 = sand.u32 %s175, 1
        %s279 = scalar_lea.sflag [#allocation3], %s278
        %s280 = sand.u32 %s175, 1
        %s281 = smul.addr %s280, 16
        %s282 = scalar_lea.vmem [#allocation2], %s281
        %p283 = scmp.lt.s32.totalorder %s21, 1
        %s284 = scalar_select %p283, %s21, 1
        %s285 = smul.addr %s284, 8
        %s286 = smul.addr %s285, 8
        %s287 = scalar_lea.vmem %s0, %s286
        %p288 = scmp.lt.s32.totalorder %s21, 1
        %s289 = scalar_select %p288, %s21, 1
        %s290 = smul.addr %s289, 8
        %s291 = smul.addr %s290, 8
        %s292 = scalar_lea.vmem %s1, %s291
        %p293 = scmp.lt.s32.totalorder %s21, 1
        %s294 = scalar_select %p293, %s21, 1
        %s295 = smul.addr %s294, 8
        %s296 = smul.addr %s295, 8
        %s297 = scalar_lea.vmem %s2, %s296
        %p298 = scmp.lt.s32.totalorder %s21, 1
        %s299 = scalar_select %p298, %s21, 1
        %s300 = smul.addr %s299, 2
        %s301 = smul.addr %s300, 4
        %s302 = scalar_lea.vmem %s5, %s301
        %v303 = vld [vmem:[%s287] sm:$0xff]
        %v304 = vld [vmem:[%s287 + $0x8] sm:$0xff]
        %v305 = vld [vmem:[%s287 + $0x10] sm:$0xff]
        %v306 = vld [vmem:[%s287 + $0x18] sm:$0xff]
        %v307 = vld [vmem:[%s287 + $0x20] sm:$0xff]
        %v308 = vld [vmem:[%s287 + $0x28] sm:$0xff]
        %v309 = vld [vmem:[%s287 + $0x30] sm:$0xff]
        %v310 = vld [vmem:[%s287 + $0x38] sm:$0xff]
        %v311 = vld [vmem:[%s292] sm:$0xff]
        %v312 = vld [vmem:[%s292 + $0x8] sm:$0xff]
        %v313 = vld [vmem:[%s292 + $0x10] sm:$0xff]
        %v314 = vld [vmem:[%s292 + $0x18] sm:$0xff]
        %v315 = vld [vmem:[%s292 + $0x20] sm:$0xff]
        %v316 = vld [vmem:[%s292 + $0x28] sm:$0xff]
        %v317 = vld [vmem:[%s292 + $0x30] sm:$0xff]
        %v318 = vld [vmem:[%s292 + $0x38] sm:$0xff]
        %v319 = vld [vmem:[%s297] sm:$0xff]
        %v320 = vld [vmem:[%s297 + $0x8] sm:$0xff]
        %v321 = vld [vmem:[%s297 + $0x10] sm:$0xff]
        %v322 = vld [vmem:[%s297 + $0x18] sm:$0xff]
        %v323 = vld [vmem:[%s297 + $0x20] sm:$0xff]
        %v324 = vld [vmem:[%s297 + $0x28] sm:$0xff]
        %v325 = vld [vmem:[%s297 + $0x30] sm:$0xff]
        %v326 = vld [vmem:[%s297 + $0x38] sm:$0xff]
        %v327 = vmul.f32 %v303, 0.35355338
        %v328 = vmul.f32 %v304, 0.35355338
        %v329 = vmul.f32 %v305, 0.35355338
        %v330 = vmul.f32 %v306, 0.35355338
        %v331 = vmul.f32 %v307, 0.35355338
        %v332 = vmul.f32 %v308, 0.35355338
        %v333 = vmul.f32 %v309, 0.35355338
        %v334 = vmul.f32 %v310, 0.35355338
        %vm335 = vcmask 64512
        %v337 = vsel %vm335, %v327, 0
        %v340 = vsel %vm335, %v328, 0
        %v343 = vsel %vm335, %v311, 0
        %v346 = vsel %vm335, %v312, 0
        %348 = vmatpush.xpose.msra.mxu0 0.0
        %349 = vmatpush.xpose.msra.mxu0 0.0
        %350 = vmatpush.xpose.msra.mxu0 0.0
        %351 = vmatpush.xpose.msra.mxu0 0.0
        %352 = vmatpush.xpose.msra.mxu0 0.0
        %353 = vmatpush.xpose.msra.mxu0 0.0
        %354 = vmatpush.xpose.msra.mxu0 0.0
        %355 = vmatpush.xpose.msra.mxu0 0.0
        %356 = vmatpush.xpose.msra.mxu0 0.0
        %357 = vmatpush.xpose.msra.mxu0 0.0
        %358 = vmatpush.xpose.msra.mxu0 0.0
        %359 = vmatpush.xpose.msra.mxu0 0.0
        %360 = vmatpush.xpose.msra.mxu0 0.0
        %361 = vmatpush.xpose.msra.mxu0 0.0
        %362 = vmatpush.xpose.msra.mxu0 %v346
        %363 = vmatpush.xpose.msra.mxu0 %v343
        %364 = vmatmul.f32.gmra.mxu0 %v337
        %v365 = vpop.f32.mrf.mxu0
        %v366 = vadd.f32 0.0, %v365
        %367 = vmatmul.f32.gmra.mxu0 %v340
        %v368 = vpop.f32.mrf.mxu0
        %v369 = vadd.f32 0.0, %v368
        %370 = vdwg.mxu0
        %v372 = vsel %vm335, %v329, 0
        %v375 = vsel %vm335, %v330, 0
        %v378 = vsel %vm335, %v313, 0
        %v381 = vsel %vm335, %v314, 0
        %383 = vmatpush.xpose.msra.mxu0 0.0
        %384 = vmatpush.xpose.msra.mxu0 0.0
        %385 = vmatpush.xpose.msra.mxu0 0.0
        %386 = vmatpush.xpose.msra.mxu0 0.0
        %387 = vmatpush.xpose.msra.mxu0 0.0
        %388 = vmatpush.xpose.msra.mxu0 0.0
        %389 = vmatpush.xpose.msra.mxu0 0.0
        %390 = vmatpush.xpose.msra.mxu0 0.0
        %391 = vmatpush.xpose.msra.mxu0 0.0
        %392 = vmatpush.xpose.msra.mxu0 0.0
        %393 = vmatpush.xpose.msra.mxu0 0.0
        %394 = vmatpush.xpose.msra.mxu0 0.0
        %395 = vmatpush.xpose.msra.mxu0 0.0
        %396 = vmatpush.xpose.msra.mxu0 0.0
        %397 = vmatpush.xpose.msra.mxu0 %v381
        %398 = vmatpush.xpose.msra.mxu0 %v378
        %399 = vmatmul.f32.gmra.mxu0 %v372
        %v400 = vpop.f32.mrf.mxu0
        %v401 = vadd.f32 0.0, %v400
        %402 = vmatmul.f32.gmra.mxu0 %v375
        %v403 = vpop.f32.mrf.mxu0
        %v404 = vadd.f32 0.0, %v403
        %405 = vdwg.mxu0
        %v407 = vsel %vm335, %v331, 0
        %v410 = vsel %vm335, %v332, 0
        %v413 = vsel %vm335, %v315, 0
        %v416 = vsel %vm335, %v316, 0
        %418 = vmatpush.xpose.msra.mxu0 0.0
        %419 = vmatpush.xpose.msra.mxu0 0.0
        %420 = vmatpush.xpose.msra.mxu0 0.0
        %421 = vmatpush.xpose.msra.mxu0 0.0
        %422 = vmatpush.xpose.msra.mxu0 0.0
        %423 = vmatpush.xpose.msra.mxu0 0.0
        %424 = vmatpush.xpose.msra.mxu0 0.0
        %425 = vmatpush.xpose.msra.mxu0 0.0
        %426 = vmatpush.xpose.msra.mxu0 0.0
        %427 = vmatpush.xpose.msra.mxu0 0.0
        %428 = vmatpush.xpose.msra.mxu0 0.0
        %429 = vmatpush.xpose.msra.mxu0 0.0
        %430 = vmatpush.xpose.msra.mxu0 0.0
        %431 = vmatpush.xpose.msra.mxu0 0.0
        %432 = vmatpush.xpose.msra.mxu0 %v416
        %433 = vmatpush.xpose.msra.mxu0 %v413
        %434 = vmatmul.f32.gmra.mxu0 %v407
        %v435 = vpop.f32.mrf.mxu0
        %v436 = vadd.f32 0.0, %v435
        %437 = vmatmul.f32.gmra.mxu0 %v410
        %v438 = vpop.f32.mrf.mxu0
        %v439 = vadd.f32 0.0, %v438
        %440 = vdwg.mxu0
        %v442 = vsel %vm335, %v333, 0
        %v445 = vsel %vm335, %v334, 0
        %v448 = vsel %vm335, %v317, 0
        %v451 = vsel %vm335, %v318, 0
        %453 = vmatpush.xpose.msra.mxu0 0.0
        %454 = vmatpush.xpose.msra.mxu0 0.0
        %455 = vmatpush.xpose.msra.mxu0 0.0
        %456 = vmatpush.xpose.msra.mxu0 0.0
        %457 = vmatpush.xpose.msra.mxu0 0.0
        %458 = vmatpush.xpose.msra.mxu0 0.0
        %459 = vmatpush.xpose.msra.mxu0 0.0
        %460 = vmatpush.xpose.msra.mxu0 0.0
        %461 = vmatpush.xpose.msra.mxu0 0.0
        %462 = vmatpush.xpose.msra.mxu0 0.0
        %463 = vmatpush.xpose.msra.mxu0 0.0
        %464 = vmatpush.xpose.msra.mxu0 0.0
        %465 = vmatpush.xpose.msra.mxu0 0.0
        %466 = vmatpush.xpose.msra.mxu0 0.0
        %467 = vmatpush.xpose.msra.mxu0 %v451
        %468 = vmatpush.xpose.msra.mxu0 %v448
        %469 = vmatmul.f32.gmra.mxu0 %v442
        %v470 = vpop.f32.mrf.mxu0
        %v471 = vadd.f32 0.0, %v470
        %472 = vmatmul.f32.gmra.mxu0 %v445
        %v473 = vpop.f32.mrf.mxu0
        %v474 = vadd.f32 0.0, %v473
        %475 = vdwg.mxu0
        %vm476 = vcmask 130048
        %v477 = vsel %vm476, %v366, -inf
        %478 = vmax.xlane.f32.xlu0 %v477
        %v479 = vpop.xlane.xlu0 %478
        %v480 = vsel %vm476, %v369, -inf
        %481 = vmax.xlane.f32.xlu0 %v480
        %v482 = vpop.xlane.xlu0 %481
        %v483 = vsel %vm476, %v401, -inf
        %484 = vmax.xlane.f32.xlu0 %v483
        %v485 = vpop.xlane.xlu0 %484
        %v486 = vsel %vm476, %v404, -inf
        %487 = vmax.xlane.f32.xlu0 %v486
        %v488 = vpop.xlane.xlu0 %487
        %v489 = vsel %vm476, %v436, -inf
        %490 = vmax.xlane.f32.xlu0 %v489
        %v491 = vpop.xlane.xlu0 %490
        %v492 = vsel %vm476, %v439, -inf
        %493 = vmax.xlane.f32.xlu0 %v492
        %v494 = vpop.xlane.xlu0 %493
        %v495 = vsel %vm476, %v471, -inf
        %496 = vmax.xlane.f32.xlu0 %v495
        %v497 = vpop.xlane.xlu0 %496
        %v498 = vsel %vm476, %v474, -inf
        %499 = vmax.xlane.f32.xlu0 %v498
        %v500 = vpop.xlane.xlu0 %499
        %v501 = vsub.f32 %v366, %v479
        %v502 = vsub.f32 %v369, %v482
        %v503 = vsub.f32 %v401, %v485
        %v504 = vsub.f32 %v404, %v488
        %v505 = vsub.f32 %v436, %v491
        %v506 = vsub.f32 %v439, %v494
        %v507 = vsub.f32 %v471, %v497
        %v508 = vsub.f32 %v474, %v500
        %v509 = vmul.f32 %v501, 1.442695
        %v510 = vpow.pop %v509
        %v511 = vmul.f32 %v502, 1.442695
        %v512 = vpow.pop %v511
        %v513 = vmul.f32 %v503, 1.442695
        %v514 = vpow.pop %v513
        %v515 = vmul.f32 %v504, 1.442695
        %v516 = vpow.pop %v515
        %v517 = vmul.f32 %v505, 1.442695
        %v518 = vpow.pop %v517
        %v519 = vmul.f32 %v506, 1.442695
        %v520 = vpow.pop %v519
        %v521 = vmul.f32 %v507, 1.442695
        %v522 = vpow.pop %v521
        %v523 = vmul.f32 %v508, 1.442695
        %v524 = vpow.pop %v523
        %v525 = vsel %vm476, %v510, 0.0
        %526 = vadd.xlane.f32.xlu0 %v525
        %v527 = vpop.xlane.xlu0 %526
        %v528 = vsel %vm476, %v512, 0.0
        %529 = vadd.xlane.f32.xlu0 %v528
        %v530 = vpop.xlane.xlu0 %529
        %v531 = vsel %vm476, %v514, 0.0
        %532 = vadd.xlane.f32.xlu0 %v531
        %v533 = vpop.xlane.xlu0 %532
        %v534 = vsel %vm476, %v516, 0.0
        %535 = vadd.xlane.f32.xlu0 %v534
        %v536 = vpop.xlane.xlu0 %535
        %v537 = vsel %vm476, %v518, 0.0
        %538 = vadd.xlane.f32.xlu0 %v537
        %v539 = vpop.xlane.xlu0 %538
        %v540 = vsel %vm476, %v520, 0.0
        %541 = vadd.xlane.f32.xlu0 %v540
        %v542 = vpop.xlane.xlu0 %541
        %v543 = vsel %vm476, %v522, 0.0
        %544 = vadd.xlane.f32.xlu0 %v543
        %v545 = vpop.xlane.xlu0 %544
        %v546 = vsel %vm476, %v524, 0.0
        %547 = vadd.xlane.f32.xlu0 %v546
        %v548 = vpop.xlane.xlu0 %547
        %v549 = vrcp.pop %v527
        %v550 = vmul.f32 %v527, %v549
        %v551 = vsub.f32 1.0, %v550
        %v552 = vmul.f32 %v549, %v551
        %v553 = vadd.f32 %v549, %v552
        %vm554 = vweird.f32 %v527
        %vm555 = vweird.f32 %v549
        %vm556 = vmor %vm554, %vm555
        %v557 = vsel %vm556, %v549, %v553
        %v558 = vand.u32 2147483647, %v527
        %vm559 = vcmp.eq.f32.partialorder %v558, 8.507059e+37
        %v560 = vand.u32 %v527, 2147483648
        %v561 = vor.u32 1.1754944e-38, %v560
        %v562 = vsel %vm559, %v561, %v557
        %v563 = vmul.f32 %v510, %v562
        %v564 = vrcp.pop %v530
        %v565 = vmul.f32 %v530, %v564
        %v566 = vsub.f32 1.0, %v565
        %v567 = vmul.f32 %v564, %v566
        %v568 = vadd.f32 %v564, %v567
        %vm569 = vweird.f32 %v530
        %vm570 = vweird.f32 %v564
        %vm571 = vmor %vm569, %vm570
        %v572 = vsel %vm571, %v564, %v568
        %v573 = vand.u32 2147483647, %v530
        %vm574 = vcmp.eq.f32.partialorder %v573, 8.507059e+37
        %v575 = vand.u32 %v530, 2147483648
        %v576 = vor.u32 1.1754944e-38, %v575
        %v577 = vsel %vm574, %v576, %v572
        %v578 = vmul.f32 %v512, %v577
        %v579 = vrcp.pop %v533
        %v580 = vmul.f32 %v533, %v579
        %v581 = vsub.f32 1.0, %v580
        %v582 = vmul.f32 %v579, %v581
        %v583 = vadd.f32 %v579, %v582
        %vm584 = vweird.f32 %v533
        %vm585 = vweird.f32 %v579
        %vm586 = vmor %vm584, %vm585
        %v587 = vsel %vm586, %v579, %v583
        %v588 = vand.u32 2147483647, %v533
        %vm589 = vcmp.eq.f32.partialorder %v588, 8.507059e+37
        %v590 = vand.u32 %v533, 2147483648
        %v591 = vor.u32 1.1754944e-38, %v590
        %v592 = vsel %vm589, %v591, %v587
        %v593 = vmul.f32 %v514, %v592
        %v594 = vrcp.pop %v536
        %v595 = vmul.f32 %v536, %v594
        %v596 = vsub.f32 1.0, %v595
        %v597 = vmul.f32 %v594, %v596
        %v598 = vadd.f32 %v594, %v597
        %vm599 = vweird.f32 %v536
        %vm600 = vweird.f32 %v594
        %vm601 = vmor %vm599, %vm600
        %v602 = vsel %vm601, %v594, %v598
        %v603 = vand.u32 2147483647, %v536
        %vm604 = vcmp.eq.f32.partialorder %v603, 8.507059e+37
        %v605 = vand.u32 %v536, 2147483648
        %v606 = vor.u32 1.1754944e-38, %v605
        %v607 = vsel %vm604, %v606, %v602
        %v608 = vmul.f32 %v516, %v607
        %v609 = vrcp.pop %v539
        %v610 = vmul.f32 %v539, %v609
        %v611 = vsub.f32 1.0, %v610
        %v612 = vmul.f32 %v609, %v611
        %v613 = vadd.f32 %v609, %v612
        %vm614 = vweird.f32 %v539
        %vm615 = vweird.f32 %v609
        %vm616 = vmor %vm614, %vm615
        %v617 = vsel %vm616, %v609, %v613
        %v618 = vand.u32 2147483647, %v539
        %vm619 = vcmp.eq.f32.partialorder %v618, 8.507059e+37
        %v620 = vand.u32 %v539, 2147483648
        %v621 = vor.u32 1.1754944e-38, %v620
        %v622 = vsel %vm619, %v621, %v617
        %v623 = vmul.f32 %v518, %v622
        %v624 = vrcp.pop %v542
        %v625 = vmul.f32 %v542, %v624
        %v626 = vsub.f32 1.0, %v625
        %v627 = vmul.f32 %v624, %v626
        %v628 = vadd.f32 %v624, %v627
        %vm629 = vweird.f32 %v542
        %vm630 = vweird.f32 %v624
        %vm631 = vmor %vm629, %vm630
        %v632 = vsel %vm631, %v624, %v628
        %v633 = vand.u32 2147483647, %v542
        %vm634 = vcmp.eq.f32.partialorder %v633, 8.507059e+37
        %v635 = vand.u32 %v542, 2147483648
        %v636 = vor.u32 1.1754944e-38, %v635
        %v637 = vsel %vm634, %v636, %v632
        %v638 = vmul.f32 %v520, %v637
        %v639 = vrcp.pop %v545
        %v640 = vmul.f32 %v545, %v639
        %v641 = vsub.f32 1.0, %v640
        %v642 = vmul.f32 %v639, %v641
        %v643 = vadd.f32 %v639, %v642
        %vm644 = vweird.f32 %v545
        %vm645 = vweird.f32 %v639
        %vm646 = vmor %vm644, %vm645
        %v647 = vsel %vm646, %v639, %v643
        %v648 = vand.u32 2147483647, %v545
        %vm649 = vcmp.eq.f32.partialorder %v648, 8.507059e+37
        %v650 = vand.u32 %v545, 2147483648
        %v651 = vor.u32 1.1754944e-38, %v650
        %v652 = vsel %vm649, %v651, %v647
        %v653 = vmul.f32 %v522, %v652
        %v654 = vrcp.pop %v548
        %v655 = vmul.f32 %v548, %v654
        %v656 = vsub.f32 1.0, %v655
        %v657 = vmul.f32 %v654, %v656
        %v658 = vadd.f32 %v654, %v657
        %vm659 = vweird.f32 %v548
        %vm660 = vweird.f32 %v654
        %vm661 = vmor %vm659, %vm660
        %v662 = vsel %vm661, %v654, %v658
        %v663 = vand.u32 2147483647, %v548
        %vm664 = vcmp.eq.f32.partialorder %v663, 8.507059e+37
        %v665 = vand.u32 %v548, 2147483648
        %v666 = vor.u32 1.1754944e-38, %v665
        %v667 = vsel %vm664, %v666, %v662
        %v668 = vmul.f32 %v524, %v667
        %v669 = vrot.slane %v623, 4
        %vm670 = vcmask 1047556
        %v671 = vsel %vm670, %v669, %v563
        %v672 = vrot.slane %v563, 4
        %v673 = vsel %vm670, %v623, %v672
        %v675 = vunpack.c.l.s4 1983009808
        %v676 = vunpack.c.0.s8 %v675
        %v677 = vperm.slane %v671, %v676
        %v679 = vunpack.c.l.s4 1983009808
        %v680 = vunpack.c.0.s8 %v679
        %v681 = vperm.slane %v673, %v680
        %v682 = vrot.slane %v653, 4
        %v683 = vsel %vm670, %v682, %v593
        %v684 = vrot.slane %v593, 4
        %v685 = vsel %vm670, %v653, %v684
        %v687 = vunpack.c.l.s4 1983009808
        %v688 = vunpack.c.0.s8 %v687
        %v689 = vperm.slane %v683, %v688
        %v691 = vunpack.c.l.s4 1983009808
        %v692 = vunpack.c.0.s8 %v691
        %v693 = vperm.slane %v685, %v692
        %v694 = vrot.slane %v689, 4
        %v695 = vsel %vm670, %v694, %v677
        %v696 = vrot.slane %v677, 4
        %v697 = vsel %vm670, %v689, %v696
        %v699 = vunpack.c.l.s4 1934713408
        %v700 = vunpack.c.0.s8 %v699
        %v701 = vperm.slane %v695, %v700
        %v703 = vunpack.c.l.s4 1934713408
        %v704 = vunpack.c.0.s8 %v703
        %v705 = vperm.slane %v697, %v704
        %v706 = vrot.slane %v693, 4
        %v707 = vsel %vm670, %v706, %v681
        %v708 = vrot.slane %v681, 4
        %v709 = vsel %vm670, %v693, %v708
        %v711 = vunpack.c.l.s4 1934713408
        %v712 = vunpack.c.0.s8 %v711
        %v713 = vperm.slane %v707, %v712
        %v715 = vunpack.c.l.s4 1934713408
        %v716 = vunpack.c.0.s8 %v715
        %v717 = vperm.slane %v709, %v716
        %v718 = vrot.slane %v701, 4
        %v719 = vsel %vm670, 0.0, %v718
        %v720 = vrot.slane %v705, 4
        %v721 = vsel %vm670, 0.0, %v720
        %v722 = vrot.slane %v713, 4
        %v723 = vsel %vm670, 0.0, %v722
        %v724 = vrot.slane %v717, 4
        %v725 = vsel %vm670, 0.0, %v724
        %v726 = vrot.slane %v638, 4
        %v727 = vsel %vm670, %v726, %v578
        %v728 = vrot.slane %v578, 4
        %v729 = vsel %vm670, %v638, %v728
        %v731 = vunpack.c.l.s4 1983009808
        %v732 = vunpack.c.0.s8 %v731
        %v733 = vperm.slane %v727, %v732
        %v735 = vunpack.c.l.s4 1983009808
        %v736 = vunpack.c.0.s8 %v735
        %v737 = vperm.slane %v729, %v736
        %v738 = vrot.slane %v668, 4
        %v739 = vsel %vm670, %v738, %v608
        %v740 = vrot.slane %v608, 4
        %v741 = vsel %vm670, %v668, %v740
        %v743 = vunpack.c.l.s4 1983009808
        %v744 = vunpack.c.0.s8 %v743
        %v745 = vperm.slane %v739, %v744
        %v747 = vunpack.c.l.s4 1983009808
        %v748 = vunpack.c.0.s8 %v747
        %v749 = vperm.slane %v741, %v748
        %v750 = vrot.slane %v745, 4
        %v751 = vsel %vm670, %v750, %v733
        %v752 = vrot.slane %v733, 4
        %v753 = vsel %vm670, %v745, %v752
        %v755 = vunpack.c.l.s4 1934713408
        %v756 = vunpack.c.0.s8 %v755
        %v757 = vperm.slane %v751, %v756
        %v759 = vunpack.c.l.s4 1934713408
        %v760 = vunpack.c.0.s8 %v759
        %v761 = vperm.slane %v753, %v760
        %v762 = vrot.slane %v749, 4
        %v763 = vsel %vm670, %v762, %v737
        %v764 = vrot.slane %v737, 4
        %v765 = vsel %vm670, %v749, %v764
        %v767 = vunpack.c.l.s4 1934713408
        %v768 = vunpack.c.0.s8 %v767
        %v769 = vperm.slane %v763, %v768
        %v771 = vunpack.c.l.s4 1934713408
        %v772 = vunpack.c.0.s8 %v771
        %v773 = vperm.slane %v765, %v772
        %v774 = vrot.slane %v757, 4
        %v775 = vsel %vm670, 0.0, %v774
        %v776 = vrot.slane %v761, 4
        %v777 = vsel %vm670, 0.0, %v776
        %v778 = vrot.slane %v769, 4
        %v779 = vsel %vm670, 0.0, %v778
        %v780 = vrot.slane %v773, 4
        %v781 = vsel %vm670, 0.0, %v780
        %783 = vrot.lane.b32.xlu0 %v719, 16
        %v784 = vpop.permute.xlu0 %783
        %787 = vrot.lane.b32.xlu0 %v705, 32
        %v788 = vpop.permute.xlu0 %787
        %791 = vrot.lane.b32.xlu0 %v721, 48
        %v792 = vpop.permute.xlu0 %791
        %795 = vrot.lane.b32.xlu0 %v713, 64
        %v796 = vpop.permute.xlu0 %795
        %799 = vrot.lane.b32.xlu0 %v723, 80
        %v800 = vpop.permute.xlu0 %799
        %803 = vrot.lane.b32.xlu0 %v717, 96
        %v804 = vpop.permute.xlu0 %803
        %807 = vrot.lane.b32.xlu0 %v725, 112
        %v808 = vpop.permute.xlu0 %807
        %811 = vrot.lane.b32.xlu0 %v775, 16
        %v812 = vpop.permute.xlu0 %811
        %815 = vrot.lane.b32.xlu0 %v761, 32
        %v816 = vpop.permute.xlu0 %815
        %819 = vrot.lane.b32.xlu0 %v777, 48
        %v820 = vpop.permute.xlu0 %819
        %823 = vrot.lane.b32.xlu0 %v769, 64
        %v824 = vpop.permute.xlu0 %823
        %827 = vrot.lane.b32.xlu0 %v779, 80
        %v828 = vpop.permute.xlu0 %827
        %831 = vrot.lane.b32.xlu0 %v773, 96
        %v832 = vpop.permute.xlu0 %831
        %835 = vrot.lane.b32.xlu0 %v781, 112
        %v836 = vpop.permute.xlu0 %835
        %v838 = vsel %vm476, %v701, %v784
        %vm839 = vcmask 261120
        %v840 = vsel %vm839, %v838, %v788
        %vm841 = vcmask 392192
        %v842 = vsel %vm841, %v840, %v792
        %vm843 = vcmask 523264
        %v844 = vsel %vm843, %v842, %v796
        %vm845 = vcmask 654336
        %v846 = vsel %vm845, %v844, %v800
        %vm847 = vcmask 785408
        %v848 = vsel %vm847, %v846, %v804
        %vm849 = vcmask 916480
        %v850 = vsel %vm849, %v848, %v808
        %v851 = vsel %vm476, %v757, %v812
        %v852 = vsel %vm839, %v851, %v816
        %v853 = vsel %vm841, %v852, %v820
        %v854 = vsel %vm843, %v853, %v824
        %v855 = vsel %vm845, %v854, %v828
        %v856 = vsel %vm847, %v855, %v832
        %v857 = vsel %vm849, %v856, %v836
        %v860 = vrot.slane %v857, 4
        %vm861 = vcmask 1043456
        %v862 = vsel %vm861, %v850, %v860
        %864 = vst [vmem:[%s302] sm:$0xff] %v862
        %v866 = vsel %vm476, %v563, 0
        %v869 = vsel %vm476, %v578, 0
        %871 = vmatpush.msra.mxu0 0.0
        %872 = vmatpush.msra.mxu0 0.0
        %873 = vmatpush.msra.mxu0 0.0
        %874 = vmatpush.msra.mxu0 0.0
        %875 = vmatpush.msra.mxu0 0.0
        %876 = vmatpush.msra.mxu0 0.0
        %877 = vmatpush.msra.mxu0 0.0
        %878 = vmatpush.msra.mxu0 0.0
        %879 = vmatpush.msra.mxu0 0.0
        %880 = vmatpush.msra.mxu0 0.0
        %881 = vmatpush.msra.mxu0 0.0
        %882 = vmatpush.msra.mxu0 0.0
        %883 = vmatpush.msra.mxu0 0.0
        %884 = vmatpush.msra.mxu0 0.0
        %885 = vmatpush.msra.mxu0 %v320
        %886 = vmatpush.msra.mxu0 %v319
        %887 = vmatmul.f32.gmra.mxu0 %v866
        %v888 = vpop.f32.mrf.mxu0
        %v889 = vadd.f32 0.0, %v888
        %890 = vmatmul.f32.gmra.mxu0 %v869
        %v891 = vpop.f32.mrf.mxu0
        %v892 = vadd.f32 0.0, %v891
        %893 = vdwg.mxu0
        %v895 = vsel %vm476, %v593, 0
        %v898 = vsel %vm476, %v608, 0
        %900 = vmatpush.msra.mxu0 0.0
        %901 = vmatpush.msra.mxu0 0.0
        %902 = vmatpush.msra.mxu0 0.0
        %903 = vmatpush.msra.mxu0 0.0
        %904 = vmatpush.msra.mxu0 0.0
        %905 = vmatpush.msra.mxu0 0.0
        %906 = vmatpush.msra.mxu0 0.0
        %907 = vmatpush.msra.mxu0 0.0
        %908 = vmatpush.msra.mxu0 0.0
        %909 = vmatpush.msra.mxu0 0.0
        %910 = vmatpush.msra.mxu0 0.0
        %911 = vmatpush.msra.mxu0 0.0
        %912 = vmatpush.msra.mxu0 0.0
        %913 = vmatpush.msra.mxu0 0.0
        %914 = vmatpush.msra.mxu0 %v322
        %915 = vmatpush.msra.mxu0 %v321
        %916 = vmatmul.f32.gmra.mxu0 %v895
        %v917 = vpop.f32.mrf.mxu0
        %v918 = vadd.f32 0.0, %v917
        %919 = vmatmul.f32.gmra.mxu0 %v898
        %v920 = vpop.f32.mrf.mxu0
        %v921 = vadd.f32 0.0, %v920
        %922 = vdwg.mxu0
        %v924 = vsel %vm476, %v623, 0
        %v927 = vsel %vm476, %v638, 0
        %929 = vmatpush.msra.mxu0 0.0
        %930 = vmatpush.msra.mxu0 0.0
        %931 = vmatpush.msra.mxu0 0.0
        %932 = vmatpush.msra.mxu0 0.0
        %933 = vmatpush.msra.mxu0 0.0
        %934 = vmatpush.msra.mxu0 0.0
        %935 = vmatpush.msra.mxu0 0.0
        %936 = vmatpush.msra.mxu0 0.0
        %937 = vmatpush.msra.mxu0 0.0
        %938 = vmatpush.msra.mxu0 0.0
        %939 = vmatpush.msra.mxu0 0.0
        %940 = vmatpush.msra.mxu0 0.0
        %941 = vmatpush.msra.mxu0 0.0
        %942 = vmatpush.msra.mxu0 0.0
        %943 = vmatpush.msra.mxu0 %v324
        %944 = vmatpush.msra.mxu0 %v323
        %945 = vmatmul.f32.gmra.mxu0 %v924
        %v946 = vpop.f32.mrf.mxu0
        %v947 = vadd.f32 0.0, %v946
        %948 = vmatmul.f32.gmra.mxu0 %v927
        %v949 = vpop.f32.mrf.mxu0
        %v950 = vadd.f32 0.0, %v949
        %951 = vdwg.mxu0
        %v953 = vsel %vm476, %v653, 0
        %v956 = vsel %vm476, %v668, 0
        %958 = vmatpush.msra.mxu0 0.0
        %959 = vmatpush.msra.mxu0 0.0
        %960 = vmatpush.msra.mxu0 0.0
        %961 = vmatpush.msra.mxu0 0.0
        %962 = vmatpush.msra.mxu0 0.0
        %963 = vmatpush.msra.mxu0 0.0
        %964 = vmatpush.msra.mxu0 0.0
        %965 = vmatpush.msra.mxu0 0.0
        %966 = vmatpush.msra.mxu0 0.0
        %967 = vmatpush.msra.mxu0 0.0
        %968 = vmatpush.msra.mxu0 0.0
        %969 = vmatpush.msra.mxu0 0.0
        %970 = vmatpush.msra.mxu0 0.0
        %971 = vmatpush.msra.mxu0 0.0
        %972 = vmatpush.msra.mxu0 %v326
        %973 = vmatpush.msra.mxu0 %v325
        %974 = vmatmul.f32.gmra.mxu0 %v953
        %v975 = vpop.f32.mrf.mxu0
        %v976 = vadd.f32 0.0, %v975
        %977 = vmatmul.f32.gmra.mxu0 %v956
        %v978 = vpop.f32.mrf.mxu0
        %v979 = vadd.f32 0.0, %v978
        %980 = vdwg.mxu0
        %v981 = vld [vmem:[%s3] sm:$0xff]
        %v982 = vld [vmem:[%s3 + $0x8] sm:$0xff]
        %v983 = vld [vmem:[%s3 + $0x10] sm:$0xff]
        %v984 = vld [vmem:[%s3 + $0x18] sm:$0xff]
        %v986 = vsel %vm335, %v918, 0
        %v989 = vsel %vm335, %v921, 0
        %991 = vmatpush.msra.mxu0 0.0
        %992 = vmatpush.msra.mxu0 0.0
        %993 = vmatpush.msra.mxu0 0.0
        %994 = vmatpush.msra.mxu0 0.0
        %995 = vmatpush.msra.mxu0 0.0
        %996 = vmatpush.msra.mxu0 0.0
        %997 = vmatpush.msra.mxu0 0.0
        %998 = vmatpush.msra.mxu0 0.0
        %999 = vmatpush.msra.mxu0 0.0
        %1000 = vmatpush.msra.mxu0 0.0
        %1001 = vmatpush.msra.mxu0 0.0
        %1002 = vmatpush.msra.mxu0 0.0
        %1003 = vmatpush.msra.mxu0 0.0
        %1004 = vmatpush.msra.mxu0 0.0
        %1005 = vmatpush.msra.mxu0 0.0
        %1006 = vmatpush.msra.mxu0 %v982
        %1007 = vmatmul.f32.gmra.mxu0 %v986
        %v1008 = vpop.f32.mrf.mxu0
        %v1009 = vadd.f32 0.0, %v1008
        %1010 = vmatmul.f32.gmra.mxu0 %v989
        %v1011 = vpop.f32.mrf.mxu0
        %v1012 = vadd.f32 0.0, %v1011
        %1013 = vdwg.mxu0
        %v1015 = vsel %vm335, %v889, 0
        %v1018 = vsel %vm335, %v892, 0
        %1020 = vmatpush.msra.mxu0 0.0
        %1021 = vmatpush.msra.mxu0 0.0
        %1022 = vmatpush.msra.mxu0 0.0
        %1023 = vmatpush.msra.mxu0 0.0
        %1024 = vmatpush.msra.mxu0 0.0
        %1025 = vmatpush.msra.mxu0 0.0
        %1026 = vmatpush.msra.mxu0 0.0
        %1027 = vmatpush.msra.mxu0 0.0
        %1028 = vmatpush.msra.mxu0 0.0
        %1029 = vmatpush.msra.mxu0 0.0
        %1030 = vmatpush.msra.mxu0 0.0
        %1031 = vmatpush.msra.mxu0 0.0
        %1032 = vmatpush.msra.mxu0 0.0
        %1033 = vmatpush.msra.mxu0 0.0
        %1034 = vmatpush.msra.mxu0 0.0
        %1035 = vmatpush.msra.mxu0 %v981
        %1036 = vmatmul.f32.gmra.mxu0 %v1015
        %v1037 = vpop.f32.mrf.mxu0
        %v1038 = vadd.f32 %v1009, %v1037
        %1039 = vmatmul.f32.gmra.mxu0 %v1018
        %v1040 = vpop.f32.mrf.mxu0
        %v1041 = vadd.f32 %v1012, %v1040
        %1042 = vdwg.mxu0
        %v1044 = vsel %vm335, %v947, 0
        %v1047 = vsel %vm335, %v950, 0
        %1049 = vmatpush.msra.mxu0 0.0
        %1050 = vmatpush.msra.mxu0 0.0
        %1051 = vmatpush.msra.mxu0 0.0
        %1052 = vmatpush.msra.mxu0 0.0
        %1053 = vmatpush.msra.mxu0 0.0
        %1054 = vmatpush.msra.mxu0 0.0
        %1055 = vmatpush.msra.mxu0 0.0
        %1056 = vmatpush.msra.mxu0 0.0
        %1057 = vmatpush.msra.mxu0 0.0
        %1058 = vmatpush.msra.mxu0 0.0
        %1059 = vmatpush.msra.mxu0 0.0
        %1060 = vmatpush.msra.mxu0 0.0
        %1061 = vmatpush.msra.mxu0 0.0
        %1062 = vmatpush.msra.mxu0 0.0
        %1063 = vmatpush.msra.mxu0 0.0
        %1064 = vmatpush.msra.mxu0 %v983
        %1065 = vmatmul.f32.gmra.mxu0 %v1044
        %v1066 = vpop.f32.mrf.mxu0
        %v1067 = vadd.f32 0.0, %v1066
        %1068 = vmatmul.f32.gmra.mxu0 %v1047
        %v1069 = vpop.f32.mrf.mxu0
        %v1070 = vadd.f32 0.0, %v1069
        %1071 = vdwg.mxu0
        %v1072 = vadd.f32 %v1038, %v1067
        %v1073 = vadd.f32 %v1041, %v1070
        %v1075 = vsel %vm335, %v976, 0
        %v1078 = vsel %vm335, %v979, 0
        %1080 = vmatpush.msra.mxu0 0.0
        %1081 = vmatpush.msra.mxu0 0.0
        %1082 = vmatpush.msra.mxu0 0.0
        %1083 = vmatpush.msra.mxu0 0.0
        %1084 = vmatpush.msra.mxu0 0.0
        %1085 = vmatpush.msra.mxu0 0.0
        %1086 = vmatpush.msra.mxu0 0.0
        %1087 = vmatpush.msra.mxu0 0.0
        %1088 = vmatpush.msra.mxu0 0.0
        %1089 = vmatpush.msra.mxu0 0.0
        %1090 = vmatpush.msra.mxu0 0.0
        %1091 = vmatpush.msra.mxu0 0.0
        %1092 = vmatpush.msra.mxu0 0.0
        %1093 = vmatpush.msra.mxu0 0.0
        %1094 = vmatpush.msra.mxu0 0.0
        %1095 = vmatpush.msra.mxu0 %v984
        %1096 = vmatmul.f32.gmra.mxu0 %v1075
        %v1097 = vpop.f32.mrf.mxu0
        %v1098 = vadd.f32 0.0, %v1097
        %1099 = vmatmul.f32.gmra.mxu0 %v1078
        %v1100 = vpop.f32.mrf.mxu0
        %v1101 = vadd.f32 0.0, %v1100
        %1102 = vdwg.mxu0
        %v1103 = vadd.f32 %v1072, %v1098
        %v1104 = vadd.f32 %v1073, %v1101
        %v1105 = vld [vmem:[%s4] sm:$0x1]
        %v1107 = vperm.slane %v1105, 0
        %v1109 = vadd.f32 %v1103, %v1107
        %v1110 = vadd.f32 %v1104, %v1107
        %1111 = vst.msk [vmem:[%s282] sm:$0xff] %vm839, %v1109
        %1112 = vst.msk [vmem:[%s282 + $0x8] sm:$0xff] %vm839, %v1110
        %p1113 = scmp.lt.s32.totalorder %s21, 1
        %s1114 = scalar_select %p1113, %s21, 1
        %s1115 = smul.addr %s1114, 2
        %s1116 = smul.addr %s1115, 4
        %s1117 = scalar_lea.vmem %s5, %s1116
        %s1118 = sand.u32 %s175, 1
        %s1119 = scalar_lea.sflag [#allocation3], %s1118
        %s1120 = sand.u32 %s175, 1
        %s1121 = smul.addr %s1120, 16
        %s1122 = scalar_lea.vmem [#allocation2], %s1121
        // Predicated region
        $region41: #{_lambda_.3} parent=39 // pred_check
          %p1123 = pneg %p159
        $region42: #{_lambda_.3} parent=39 // pred_check_branch
          %1125 = sbr.rel (%p1123) target = $region44
        $region43: #{_lambda_.3} parent=39 // pred_region
          _
        $region44: #{_lambda_.3} parent=39 // pred_fallthru
          _
        // Predicated region
        $region45: #{_lambda_.3} parent=39 // pred_check
          %p1126 = pneg %p185
        $region46: #{_lambda_.3} parent=39 // pred_check_branch
          %1128 = sbr.rel (%p1126) target = $region48
        $region47: #{_lambda_.3} parent=39 // pred_region
          %1130 = vsyncadd %s1119, 0
          %s1131 = smul.addr %s21, 2
          %s1132 = smul.addr %s1131, 8
          %s1133 = scalar_lea.hbm %s6, %s1132
          %s1134 = sshll.u32 %s1122, 4
          %s1135 = int_to_ptr.vmem [resolvable:$true] %s1134
          %s1136 = sshll.u32 %s1133, 4
          %s1137 = int_to_ptr.hbm [resolvable:$true] %s1136
          %1142 = dma.vmem_to_hbm [thread:$0]  %s1135, 256, %s1137, %s1119, 128, 128, 8
        $region48: #{_lambda_.3} parent=39 // pred_fallthru
          _
      $region40: #{_lambda_.3} parent=5 // pred_fallthru
        _
      %p1143 = scmp.le.s32.totalorder 2, %s16
      // Predicated region
      $region49: #{_lambda_.3} parent=5 // pred_check
        %p1144 = pneg %p1143
      $region50: #{_lambda_.3} parent=5 // pred_check_branch
        %1146 = sbr.rel (%p1144) target = $region52
      $region51: #{_lambda_.3} parent=5 // pred_region
        %s1147 = ssub.s32 %s16, 2
        // Predicated region
        $region53: #{_lambda_.3} parent=51 // pred_check
          %p1148 = pneg %p165
        $region54: #{_lambda_.3} parent=51 // pred_check_branch
          %1150 = sbr.rel (%p1148) target = $region56
        $region55: #{_lambda_.3} parent=51 // pred_region
          %p1151 = scmp.lt.s32.totalorder %s22, 1
          %s1152 = scalar_select %p1151, %s22, 1
          %s1153 = smul.addr %s1152, 2
          %s1154 = smul.addr %s1153, 4
          %s1155 = scalar_lea.vmem %s5, %s1154
        $region56: #{_lambda_.3} parent=51 // pred_fallthru
          _
        // Predicated region
        $region57: #{_lambda_.3} parent=51 // pred_check
          %p1156 = pneg %p191
        $region58: #{_lambda_.3} parent=51 // pred_check_branch
          %1158 = sbr.rel (%p1156) target = $region60
        $region59: #{_lambda_.3} parent=51 // pred_region
          %s1159 = sand.u32 %s176, 1
          %s1160 = scalar_lea.sflag [#allocation3], %s1159
          %s1161 = sand.u32 %s176, 1
          %s1162 = smul.addr %s1161, 16
          %s1163 = scalar_lea.vmem [#allocation2], %s1162
          %1165 = dma.done %s1160, 256
        $region60: #{_lambda_.3} parent=51 // pred_fallthru
          _
      $region52: #{_lambda_.3} parent=5 // pred_fallthru
        _
    $region6: #{_lambda_.3} parent=1 // loop_footer
      %s20 = sadd.s32 1, %s16
    $region7: #{_lambda_.3} parent=1 // loop_footer_branch
      %15 = sbr.rel target = $region3
    $region8: #{_lambda_.3} parent=1 // loop_exit
      _
    %1166 = vsyncpa [#allocation3], 1
    %s1167 = scalar_lea.sflag [#allocation3], 1
    %1168 = vsyncpa %s1167, 1

// kernel: _lambda_.2
$region0: #{_lambda_.2}
  #allocation0 [shape = 'u32[]', space=smem, size = 0x4, offset = 0x4, fixed_abs, tag = 'smem constant byte address 0x4 - core index']
  #allocation1 [shape = 'u32[72,128]{1,0:T(1,128)}', space=vmem, size = 0x9000, scoped, tag = 'internal scratch']
  %s0 = inlined_call_operand.vmem [shape: f32[2,4,16,8], index: 0, kind: input, shape index: {}]
  %s1 = inlined_call_operand.vmem [shape: f32[2,4,16,8], index: 1, kind: input, shape index: {}]
  %s2 = inlined_call_operand.vmem [shape: f32[2,4,16,8], index: 2, kind: input, shape index: {}]
  %s3 = inlined_call_operand.vmem [shape: f32[4,8,32], index: 3, kind: input, shape index: {}]
  %s4 = inlined_call_operand.vmem [shape: f32[1,32], index: 4, kind: input, shape index: {}]
  %s5 = inlined_call_operand.vmem [shape: f32[2,4,256], index: 5, kind: output, shape index: {0}]
  %s6 = inlined_call_operand.vmem [shape: f32[2,16,32], index: 6, kind: output, shape index: {1}]
  %7 = xla_tuple %s5, %s6
  %s8 = sld [smem:[#allocation0]]
  $region61: #{_lambda_.2} parent=0
    _
  %s10 = ssub.s32 1, %s8
  %s11 = scalar_select 0, %s10, %s8
  loop: start=0, step=1, limit=4
  $region2: #{_lambda_.2} parent=0 // loop_pre_header
    _
  $region3: #{_lambda_.2} parent=0 // loop_header
    %s13 = sphi 0, %s17
    %p14 = scmp.ge.s32.totalorder %s13, 4
    %s23 = sphi 0, %s25
    %s26 = sphi 0, %s23
    %s27 = sphi 0, %s26
    %s43 = sphi 0, %s27
    %s49 = sphi 0, %s51
    %s52 = sphi 0, %s49
    %s53 = sphi 0, %s52
    %s69 = sphi 0, %s53
    %s75 = sphi 0, %s77
    %s78 = sphi 0, %s75
    %s79 = sphi 0, %s78
    %s95 = sphi 0, %s79
    %s99 = sphi 0, %s99
    %s101 = sphi 0, %s99
    %s102 = sphi 0, %s101
    %s116 = sphi 0, %s102
    %s120 = sphi 0, %s120
    %s122 = sphi 0, %s120
    %s123 = sphi 0, %s122
    %s137 = sphi 0, %s123
    %s143 = sphi 0, %s145
    %s146 = sphi 0, %s143
    %s147 = sphi 0, %s146
    %s163 = sphi 0, %s147
    %s169 = sphi 0, %s171
    %s172 = sphi 0, %s169
    %s173 = sphi 0, %s172
    %s189 = sphi 0, %s173
  $region4: #{_lambda_.2} parent=0 // loop_header_branch
    %16 = sbr.rel (%p14) target = $region8
  $region5: #{_lambda_.2} parent=0 // loop_body
    %s18 = ssub.s32 %s13, 1
    %s19 = ssub.s32 %s13, 2
    %s20 = sadd.s32 %s13, 1
    %s21 = ssub.s32 %s13, %s20
    %p22 = scmp.eq.s32.totalorder %s21, 0
    %s24 = sadd.s32 %s23, 1
    %s25 = scalar_select %p22, %s23, %s24
    %p28 = pneg %p22
    %p29 = scmp.eq.s32.totalorder %s13, 1
    %p30 = por %p28, %p29
    %p31 = scmp.ne.s32.totalorder %s23, %s26
    %p32 = scmp.eq.s32.totalorder %s13, 0
    %p33 = por %p31, %p32
    %p34 = scmp.ne.s32.totalorder %s23, %s26
    %p35 = scmp.eq.s32.totalorder %s18, 1
    %p36 = por %p34, %p35
    %p37 = scmp.ne.s32.totalorder %s26, %s27
    %p38 = scmp.eq.s32.totalorder %s18, 0
    %p39 = por %p37, %p38
    %p40 = scmp.ne.s32.totalorder %s26, %s27
    %p41 = scmp.eq.s32.totalorder %s19, 1
    %p42 = por %p40, %p41
    %p44 = scmp.ne.s32.totalorder %s27, %s43
    %p45 = scmp.eq.s32.totalorder %s19, 0
    %p46 = por %p44, %p45
    %s47 = ssub.s32 %s13, %s20
    %p48 = scmp.eq.s32.totalorder %s47, 0
    %s50 = sadd.s32 %s49, 1
    %s51 = scalar_select %p48, %s49, %s50
    %p54 = pneg %p48
    %p55 = scmp.eq.s32.totalorder %s13, 1
    %p56 = por %p54, %p55
    %p57 = scmp.ne.s32.totalorder %s49, %s52
    %p58 = scmp.eq.s32.totalorder %s13, 0
    %p59 = por %p57, %p58
    %p60 = scmp.ne.s32.totalorder %s49, %s52
    %p61 = scmp.eq.s32.totalorder %s18, 1
    %p62 = por %p60, %p61
    %p63 = scmp.ne.s32.totalorder %s52, %s53
    %p64 = scmp.eq.s32.totalorder %s18, 0
    %p65 = por %p63, %p64
    %p66 = scmp.ne.s32.totalorder %s52, %s53
    %p67 = scmp.eq.s32.totalorder %s19, 1
    %p68 = por %p66, %p67
    %p70 = scmp.ne.s32.totalorder %s53, %s69
    %p71 = scmp.eq.s32.totalorder %s19, 0
    %p72 = por %p70, %p71
    %s73 = ssub.s32 %s13, %s20
    %p74 = scmp.eq.s32.totalorder %s73, 0
    %s76 = sadd.s32 %s75, 1
    %s77 = scalar_select %p74, %s75, %s76
    %p80 = pneg %p74
    %p81 = scmp.eq.s32.totalorder %s13, 1
    %p82 = por %p80, %p81
    %p83 = scmp.ne.s32.totalorder %s75, %s78
    %p84 = scmp.eq.s32.totalorder %s13, 0
    %p85 = por %p83, %p84
    %p86 = scmp.ne.s32.totalorder %s75, %s78
    %p87 = scmp.eq.s32.totalorder %s18, 1
    %p88 = por %p86, %p87
    %p89 = scmp.ne.s32.totalorder %s78, %s79
    %p90 = scmp.eq.s32.totalorder %s18, 0
    %p91 = por %p89, %p90
    %p92 = scmp.ne.s32.totalorder %s78, %s79
    %p93 = scmp.eq.s32.totalorder %s19, 1
    %p94 = por %p92, %p93
    %p96 = scmp.ne.s32.totalorder %s79, %s95
    %p97 = scmp.eq.s32.totalorder %s19, 0
    %p98 = por %p96, %p97
    %s100 = sadd.s32 %s99, 1
    %p103 = scmp.eq.s32.totalorder %s13, 1
    %p104 = scmp.ne.s32.totalorder %s99, %s101
    %p105 = scmp.eq.s32.totalorder %s13, 0
    %p106 = por %p104, %p105
    %p107 = scmp.ne.s32.totalorder %s99, %s101
    %p108 = scmp.eq.s32.totalorder %s18, 1
    %p109 = por %p107, %p108
    %p110 = scmp.ne.s32.totalorder %s101, %s102
    %p111 = scmp.eq.s32.totalorder %s18, 0
    %p112 = por %p110, %p111
    %p113 = scmp.ne.s32.totalorder %s101, %s102
    %p114 = scmp.eq.s32.totalorder %s19, 1
    %p115 = por %p113, %p114
    %p117 = scmp.ne.s32.totalorder %s102, %s116
    %p118 = scmp.eq.s32.totalorder %s19, 0
    %p119 = por %p117, %p118
    %s121 = sadd.s32 %s120, 1
    %p124 = scmp.eq.s32.totalorder %s13, 1
    %p125 = scmp.ne.s32.totalorder %s120, %s122
    %p126 = scmp.eq.s32.totalorder %s13, 0
    %p127 = por %p125, %p126
    %p128 = scmp.ne.s32.totalorder %s120, %s122
    %p129 = scmp.eq.s32.totalorder %s18, 1
    %p130 = por %p128, %p129
    %p131 = scmp.ne.s32.totalorder %s122, %s123
    %p132 = scmp.eq.s32.totalorder %s18, 0
    %p133 = por %p131, %p132
    %p134 = scmp.ne.s32.totalorder %s122, %s123
    %p135 = scmp.eq.s32.totalorder %s19, 1
    %p136 = por %p134, %p135
    %p138 = scmp.ne.s32.totalorder %s123, %s137
    %p139 = scmp.eq.s32.totalorder %s19, 0
    %p140 = por %p138, %p139
    %s141 = ssub.s32 %s13, %s20
    %p142 = scmp.eq.s32.totalorder %s141, 0
    %s144 = sadd.s32 %s143, 1
    %s145 = scalar_select %p142, %s143, %s144
    %p148 = pneg %p142
    %p149 = scmp.eq.s32.totalorder %s13, 1
    %p150 = por %p148, %p149
    %p151 = scmp.ne.s32.totalorder %s143, %s146
    %p152 = scmp.eq.s32.totalorder %s13, 0
    %p153 = por %p151, %p152
    %p154 = scmp.ne.s32.totalorder %s143, %s146
    %p155 = scmp.eq.s32.totalorder %s18, 1
    %p156 = por %p154, %p155
    %p157 = scmp.ne.s32.totalorder %s146, %s147
    %p158 = scmp.eq.s32.totalorder %s18, 0
    %p159 = por %p157, %p158
    %p160 = scmp.ne.s32.totalorder %s146, %s147
    %p161 = scmp.eq.s32.totalorder %s19, 1
    %p162 = por %p160, %p161
    %p164 = scmp.ne.s32.totalorder %s147, %s163
    %p165 = scmp.eq.s32.totalorder %s19, 0
    %p166 = por %p164, %p165
    %s167 = ssub.s32 %s13, %s20
    %p168 = scmp.eq.s32.totalorder %s167, 0
    %s170 = sadd.s32 %s169, 1
    %s171 = scalar_select %p168, %s169, %s170
    %p174 = pneg %p168
    %p175 = scmp.eq.s32.totalorder %s13, 1
    %p176 = por %p174, %p175
    %p177 = scmp.ne.s32.totalorder %s169, %s172
    %p178 = scmp.eq.s32.totalorder %s13, 0
    %p179 = por %p177, %p178
    %p180 = scmp.ne.s32.totalorder %s169, %s172
    %p181 = scmp.eq.s32.totalorder %s18, 1
    %p182 = por %p180, %p181
    %p183 = scmp.ne.s32.totalorder %s172, %s173
    %p184 = scmp.eq.s32.totalorder %s18, 0
    %p185 = por %p183, %p184
    %p186 = scmp.ne.s32.totalorder %s172, %s173
    %p187 = scmp.eq.s32.totalorder %s19, 1
    %p188 = por %p186, %p187
    %p190 = scmp.ne.s32.totalorder %s173, %s189
    %p191 = scmp.eq.s32.totalorder %s19, 0
    %p192 = por %p190, %p191
    %p193 = scmp.le.s32.totalorder 1, %s13
    %p194 = scmp.lt.s32.totalorder %s13, 3
    %p195 = pnand %p193, %p194
    %p196 = pneg %p195
    // Predicated region
    $region9: #{_lambda_.2} parent=5 // pred_check
      _
    $region10: #{_lambda_.2} parent=5 // pred_check_branch
      %198 = sbr.rel (%p195) target = $region12
    $region11: #{_lambda_.2} parent=5 // pred_region
      %s199 = ssub.s32 %s13, 1
      // Predicated region
      $region13: #{_lambda_.2} parent=11 // pred_check
        %p200 = pneg %p112
      $region14: #{_lambda_.2} parent=11 // pred_check_branch
        %202 = sbr.rel (%p200) target = $region16
      $region15: #{_lambda_.2} parent=11 // pred_region
        _
      $region16: #{_lambda_.2} parent=11 // pred_fallthru
        _
      // Predicated region
      $region17: #{_lambda_.2} parent=11 // pred_check
        %p203 = pneg %p133
      $region18: #{_lambda_.2} parent=11 // pred_check_branch
        %205 = sbr.rel (%p203) target = $region20
      $region19: #{_lambda_.2} parent=11 // pred_region
        _
      $region20: #{_lambda_.2} parent=11 // pred_fallthru
        _
    $region12: #{_lambda_.2} parent=5 // pred_fallthru
      _
    %p206 = scmp.lt.s32.totalorder %s13, 2
    // Predicated region
    $region21: #{_lambda_.2} parent=5 // pred_check
      %p207 = pneg %p206
    $region22: #{_lambda_.2} parent=5 // pred_check_branch
      %209 = sbr.rel (%p207) target = $region24
    $region23: #{_lambda_.2} parent=5 // pred_region
      // Predicated region
      $region25: #{_lambda_.2} parent=23 // pred_check
        %p210 = pneg %p33
      $region26: #{_lambda_.2} parent=23 // pred_check_branch
        %212 = sbr.rel (%p210) target = $region28
      $region27: #{_lambda_.2} parent=23 // pred_region
        %p213 = scmp.lt.s32.totalorder %s13, 1
        %s214 = scalar_select %p213, %s13, 1
        %s215 = smul.addr %s214, 8
        %s216 = smul.addr %s215, 8
        %s217 = scalar_lea.vmem %s0, %s216
      $region28: #{_lambda_.2} parent=23 // pred_fallthru
        _
      // Predicated region
      $region29: #{_lambda_.2} parent=23 // pred_check
        %p218 = pneg %p59
      $region30: #{_lambda_.2} parent=23 // pred_check_branch
        %220 = sbr.rel (%p218) target = $region32
      $region31: #{_lambda_.2} parent=23 // pred_region
        %p221 = scmp.lt.s32.totalorder %s13, 1
        %s222 = scalar_select %p221, %s13, 1
        %s223 = smul.addr %s222, 8
        %s224 = smul.addr %s223, 8
        %s225 = scalar_lea.vmem %s1, %s224
      $region32: #{_lambda_.2} parent=23 // pred_fallthru
        _
      // Predicated region
      $region33: #{_lambda_.2} parent=23 // pred_check
        %p226 = pneg %p85
      $region34: #{_lambda_.2} parent=23 // pred_check_branch
        %228 = sbr.rel (%p226) target = $region36
      $region35: #{_lambda_.2} parent=23 // pred_region
        %p229 = scmp.lt.s32.totalorder %s13, 1
        %s230 = scalar_select %p229, %s13, 1
        %s231 = smul.addr %s230, 8
        %s232 = smul.addr %s231, 8
        %s233 = scalar_lea.vmem %s2, %s232
      $region36: #{_lambda_.2} parent=23 // pred_fallthru
        _
    $region24: #{_lambda_.2} parent=5 // pred_fallthru
      _
    %p234 = scmp.le.s32.totalorder 1, %s13
    %p235 = scmp.lt.s32.totalorder %s13, 3
    %p236 = pnand %p234, %p235
    %p237 = pneg %p236
    // Predicated region
    $region37: #{_lambda_.2} parent=5 // pred_check
      _
    $region38: #{_lambda_.2} parent=5 // pred_check_branch
      %239 = sbr.rel (%p236) target = $region40
    $region39: #{_lambda_.2} parent=5 // pred_region
      %s240 = ssub.s32 %s13, 1
      %p241 = scmp.lt.s32.totalorder %s18, 1
      %s242 = scalar_select %p241, %s18, 1
      %s243 = smul.addr %s242, 8
      %s244 = smul.addr %s243, 8
      %s245 = scalar_lea.vmem %s0, %s244
      %p246 = pneg %p39
      %p247 = pneg %p36
      %p248 = scmp.lt.s32.totalorder %s18, 1
      %s249 = scalar_select %p248, %s18, 1
      %s250 = smul.addr %s249, 8
      %s251 = smul.addr %s250, 8
      %s252 = scalar_lea.vmem %s1, %s251
      %p253 = pneg %p65
      %p254 = pneg %p62
      %p255 = scmp.lt.s32.totalorder %s18, 1
      %s256 = scalar_select %p255, %s18, 1
      %s257 = smul.addr %s256, 8
      %s258 = smul.addr %s257, 8
      %s259 = scalar_lea.vmem %s2, %s258
      %p260 = pneg %p91
      %p261 = pneg %p88
      %p262 = pneg %p112
      %p263 = pneg %p109
      %p264 = pneg %p133
      %p265 = pneg %p130
      %p266 = pneg %p159
      %p267 = pneg %p156
      %p268 = scmp.lt.s32.totalorder %s18, 1
      %s269 = scalar_select %p268, %s18, 1
      %s270 = smul.addr %s269, 2
      %s271 = smul.addr %s270, 4
      %s272 = scalar_lea.vmem %s5, %s271
      %p273 = pneg %p185
      %p274 = pneg %p182
      %p275 = scmp.lt.s32.totalorder %s18, 1
      %s276 = scalar_select %p275, %s18, 1
      %s277 = smul.addr %s276, 2
      %s278 = smul.addr %s277, 8
      %s279 = scalar_lea.vmem %s6, %s278
      %p280 = scmp.lt.s32.totalorder %s18, 1
      %s281 = scalar_select %p280, %s18, 1
      %s282 = smul.addr %s281, 8
      %s283 = smul.addr %s282, 8
      %s284 = scalar_lea.vmem %s0, %s283
      %p285 = scmp.lt.s32.totalorder %s18, 1
      %s286 = scalar_select %p285, %s18, 1
      %s287 = smul.addr %s286, 8
      %s288 = smul.addr %s287, 8
      %s289 = scalar_lea.vmem %s1, %s288
      %p290 = scmp.lt.s32.totalorder %s18, 1
      %s291 = scalar_select %p290, %s18, 1
      %s292 = smul.addr %s291, 8
      %s293 = smul.addr %s292, 8
      %s294 = scalar_lea.vmem %s2, %s293
      %p295 = scmp.lt.s32.totalorder %s18, 1
      %s296 = scalar_select %p295, %s18, 1
      %s297 = smul.addr %s296, 2
      %s298 = smul.addr %s297, 4
      %s299 = scalar_lea.vmem %s5, %s298
      %p300 = scmp.lt.s32.totalorder %s18, 1
      %s301 = scalar_select %p300, %s18, 1
      %s302 = smul.addr %s301, 2
      %s303 = smul.addr %s302, 8
      %s304 = scalar_lea.vmem %s6, %s303
      %v305 = vld [vmem:[%s284] sm:$0xff]
      %v306 = vld [vmem:[%s284 + $0x8] sm:$0xff]
      %v307 = vld [vmem:[%s284 + $0x10] sm:$0xff]
      %v308 = vld [vmem:[%s284 + $0x18] sm:$0xff]
      %v309 = vld [vmem:[%s284 + $0x20] sm:$0xff]
      %v310 = vld [vmem:[%s284 + $0x28] sm:$0xff]
      %v311 = vld [vmem:[%s284 + $0x30] sm:$0xff]
      %v312 = vld [vmem:[%s284 + $0x38] sm:$0xff]
      %v313 = vld [vmem:[%s289] sm:$0xff]
      %v314 = vld [vmem:[%s289 + $0x8] sm:$0xff]
      %v315 = vld [vmem:[%s289 + $0x10] sm:$0xff]
      %v316 = vld [vmem:[%s289 + $0x18] sm:$0xff]
      %v317 = vld [vmem:[%s289 + $0x20] sm:$0xff]
      %v318 = vld [vmem:[%s289 + $0x28] sm:$0xff]
      %v319 = vld [vmem:[%s289 + $0x30] sm:$0xff]
      %v320 = vld [vmem:[%s289 + $0x38] sm:$0xff]
      %v321 = vld [vmem:[%s294] sm:$0xff]
      %v322 = vld [vmem:[%s294 + $0x8] sm:$0xff]
      %v323 = vld [vmem:[%s294 + $0x10] sm:$0xff]
      %v324 = vld [vmem:[%s294 + $0x18] sm:$0xff]
      %v325 = vld [vmem:[%s294 + $0x20] sm:$0xff]
      %v326 = vld [vmem:[%s294 + $0x28] sm:$0xff]
      %v327 = vld [vmem:[%s294 + $0x30] sm:$0xff]
      %v328 = vld [vmem:[%s294 + $0x38] sm:$0xff]
      %v329 = vmul.f32 %v305, 0.35355338
      %v330 = vmul.f32 %v306, 0.35355338
      %v331 = vmul.f32 %v307, 0.35355338
      %v332 = vmul.f32 %v308, 0.35355338
      %v333 = vmul.f32 %v309, 0.35355338
      %v334 = vmul.f32 %v310, 0.35355338
      %v335 = vmul.f32 %v311, 0.35355338
      %v336 = vmul.f32 %v312, 0.35355338
      %vm337 = vcmask 64512
      %v339 = vsel %vm337, %v329, 0
      %v342 = vsel %vm337, %v330, 0
      %v345 = vsel %vm337, %v313, 0
      %v348 = vsel %vm337, %v314, 0
      %350 = vmatpush.xpose.msra.mxu0 0.0
      %351 = vmatpush.xpose.msra.mxu0 0.0
      %352 = vmatpush.xpose.msra.mxu0 0.0
      %353 = vmatpush.xpose.msra.mxu0 0.0
      %354 = vmatpush.xpose.msra.mxu0 0.0
      %355 = vmatpush.xpose.msra.mxu0 0.0
      %356 = vmatpush.xpose.msra.mxu0 0.0
      %357 = vmatpush.xpose.msra.mxu0 0.0
      %358 = vmatpush.xpose.msra.mxu0 0.0
      %359 = vmatpush.xpose.msra.mxu0 0.0
      %360 = vmatpush.xpose.msra.mxu0 0.0
      %361 = vmatpush.xpose.msra.mxu0 0.0
      %362 = vmatpush.xpose.msra.mxu0 0.0
      %363 = vmatpush.xpose.msra.mxu0 0.0
      %364 = vmatpush.xpose.msra.mxu0 %v348
      %365 = vmatpush.xpose.msra.mxu0 %v345
      %366 = vmatmul.f32.gmra.mxu0 %v339
      %v367 = vpop.f32.mrf.mxu0
      %v368 = vadd.f32 0.0, %v367
      %369 = vmatmul.f32.gmra.mxu0 %v342
      %v370 = vpop.f32.mrf.mxu0
      %v371 = vadd.f32 0.0, %v370
      %372 = vdwg.mxu0
      %v374 = vsel %vm337, %v331, 0
      %v377 = vsel %vm337, %v332, 0
      %v380 = vsel %vm337, %v315, 0
      %v383 = vsel %vm337, %v316, 0
      %385 = vmatpush.xpose.msra.mxu0 0.0
      %386 = vmatpush.xpose.msra.mxu0 0.0
      %387 = vmatpush.xpose.msra.mxu0 0.0
      %388 = vmatpush.xpose.msra.mxu0 0.0
      %389 = vmatpush.xpose.msra.mxu0 0.0
      %390 = vmatpush.xpose.msra.mxu0 0.0
      %391 = vmatpush.xpose.msra.mxu0 0.0
      %392 = vmatpush.xpose.msra.mxu0 0.0
      %393 = vmatpush.xpose.msra.mxu0 0.0
      %394 = vmatpush.xpose.msra.mxu0 0.0
      %395 = vmatpush.xpose.msra.mxu0 0.0
      %396 = vmatpush.xpose.msra.mxu0 0.0
      %397 = vmatpush.xpose.msra.mxu0 0.0
      %398 = vmatpush.xpose.msra.mxu0 0.0
      %399 = vmatpush.xpose.msra.mxu0 %v383
      %400 = vmatpush.xpose.msra.mxu0 %v380
      %401 = vmatmul.f32.gmra.mxu0 %v374
      %v402 = vpop.f32.mrf.mxu0
      %v403 = vadd.f32 0.0, %v402
      %404 = vmatmul.f32.gmra.mxu0 %v377
      %v405 = vpop.f32.mrf.mxu0
      %v406 = vadd.f32 0.0, %v405
      %407 = vdwg.mxu0
      %v409 = vsel %vm337, %v333, 0
      %v412 = vsel %vm337, %v334, 0
      %v415 = vsel %vm337, %v317, 0
      %v418 = vsel %vm337, %v318, 0
      %420 = vmatpush.xpose.msra.mxu0 0.0
      %421 = vmatpush.xpose.msra.mxu0 0.0
      %422 = vmatpush.xpose.msra.mxu0 0.0
      %423 = vmatpush.xpose.msra.mxu0 0.0
      %424 = vmatpush.xpose.msra.mxu0 0.0
      %425 = vmatpush.xpose.msra.mxu0 0.0
      %426 = vmatpush.xpose.msra.mxu0 0.0
      %427 = vmatpush.xpose.msra.mxu0 0.0
      %428 = vmatpush.xpose.msra.mxu0 0.0
      %429 = vmatpush.xpose.msra.mxu0 0.0
      %430 = vmatpush.xpose.msra.mxu0 0.0
      %431 = vmatpush.xpose.msra.mxu0 0.0
      %432 = vmatpush.xpose.msra.mxu0 0.0
      %433 = vmatpush.xpose.msra.mxu0 0.0
      %434 = vmatpush.xpose.msra.mxu0 %v418
      %435 = vmatpush.xpose.msra.mxu0 %v415
      %436 = vmatmul.f32.gmra.mxu0 %v409
      %v437 = vpop.f32.mrf.mxu0
      %v438 = vadd.f32 0.0, %v437
      %439 = vmatmul.f32.gmra.mxu0 %v412
      %v440 = vpop.f32.mrf.mxu0
      %v441 = vadd.f32 0.0, %v440
      %442 = vdwg.mxu0
      %v444 = vsel %vm337, %v335, 0
      %v447 = vsel %vm337, %v336, 0
      %v450 = vsel %vm337, %v319, 0
      %v453 = vsel %vm337, %v320, 0
      %455 = vmatpush.xpose.msra.mxu0 0.0
      %456 = vmatpush.xpose.msra.mxu0 0.0
      %457 = vmatpush.xpose.msra.mxu0 0.0
      %458 = vmatpush.xpose.msra.mxu0 0.0
      %459 = vmatpush.xpose.msra.mxu0 0.0
      %460 = vmatpush.xpose.msra.mxu0 0.0
      %461 = vmatpush.xpose.msra.mxu0 0.0
      %462 = vmatpush.xpose.msra.mxu0 0.0
      %463 = vmatpush.xpose.msra.mxu0 0.0
      %464 = vmatpush.xpose.msra.mxu0 0.0
      %465 = vmatpush.xpose.msra.mxu0 0.0
      %466 = vmatpush.xpose.msra.mxu0 0.0
      %467 = vmatpush.xpose.msra.mxu0 0.0
      %468 = vmatpush.xpose.msra.mxu0 0.0
      %469 = vmatpush.xpose.msra.mxu0 %v453
      %470 = vmatpush.xpose.msra.mxu0 %v450
      %471 = vmatmul.f32.gmra.mxu0 %v444
      %v472 = vpop.f32.mrf.mxu0
      %v473 = vadd.f32 0.0, %v472
      %474 = vmatmul.f32.gmra.mxu0 %v447
      %v475 = vpop.f32.mrf.mxu0
      %v476 = vadd.f32 0.0, %v475
      %477 = vdwg.mxu0
      %vm478 = vcmask 130048
      %v479 = vsel %vm478, %v368, -inf
      %480 = vmax.xlane.f32.xlu0 %v479
      %v481 = vpop.xlane.xlu0 %480
      %v482 = vsel %vm478, %v371, -inf
      %483 = vmax.xlane.f32.xlu0 %v482
      %v484 = vpop.xlane.xlu0 %483
      %v485 = vsel %vm478, %v403, -inf
      %486 = vmax.xlane.f32.xlu0 %v485
      %v487 = vpop.xlane.xlu0 %486
      %v488 = vsel %vm478, %v406, -inf
      %489 = vmax.xlane.f32.xlu0 %v488
      %v490 = vpop.xlane.xlu0 %489
      %v491 = vsel %vm478, %v438, -inf
      %492 = vmax.xlane.f32.xlu0 %v491
      %v493 = vpop.xlane.xlu0 %492
      %v494 = vsel %vm478, %v441, -inf
      %495 = vmax.xlane.f32.xlu0 %v494
      %v496 = vpop.xlane.xlu0 %495
      %v497 = vsel %vm478, %v473, -inf
      %498 = vmax.xlane.f32.xlu0 %v497
      %v499 = vpop.xlane.xlu0 %498
      %v500 = vsel %vm478, %v476, -inf
      %501 = vmax.xlane.f32.xlu0 %v500
      %v502 = vpop.xlane.xlu0 %501
      %v503 = vsub.f32 %v368, %v481
      %v504 = vsub.f32 %v371, %v484
      %v505 = vsub.f32 %v403, %v487
      %v506 = vsub.f32 %v406, %v490
      %v507 = vsub.f32 %v438, %v493
      %v508 = vsub.f32 %v441, %v496
      %v509 = vsub.f32 %v473, %v499
      %v510 = vsub.f32 %v476, %v502
      %v511 = vmul.f32 %v503, 1.442695
      %v512 = vpow.pop %v511
      %v513 = vmul.f32 %v504, 1.442695
      %v514 = vpow.pop %v513
      %v515 = vmul.f32 %v505, 1.442695
      %v516 = vpow.pop %v515
      %v517 = vmul.f32 %v506, 1.442695
      %v518 = vpow.pop %v517
      %v519 = vmul.f32 %v507, 1.442695
      %v520 = vpow.pop %v519
      %v521 = vmul.f32 %v508, 1.442695
      %v522 = vpow.pop %v521
      %v523 = vmul.f32 %v509, 1.442695
      %v524 = vpow.pop %v523
      %v525 = vmul.f32 %v510, 1.442695
      %v526 = vpow.pop %v525
      %v527 = vsel %vm478, %v512, 0.0
      %528 = vadd.xlane.f32.xlu0 %v527
      %v529 = vpop.xlane.xlu0 %528
      %v530 = vsel %vm478, %v514, 0.0
      %531 = vadd.xlane.f32.xlu0 %v530
      %v532 = vpop.xlane.xlu0 %531
      %v533 = vsel %vm478, %v516, 0.0
      %534 = vadd.xlane.f32.xlu0 %v533
      %v535 = vpop.xlane.xlu0 %534
      %v536 = vsel %vm478, %v518, 0.0
      %537 = vadd.xlane.f32.xlu0 %v536
      %v538 = vpop.xlane.xlu0 %537
      %v539 = vsel %vm478, %v520, 0.0
      %540 = vadd.xlane.f32.xlu0 %v539
      %v541 = vpop.xlane.xlu0 %540
      %v542 = vsel %vm478, %v522, 0.0
      %543 = vadd.xlane.f32.xlu0 %v542
      %v544 = vpop.xlane.xlu0 %543
      %v545 = vsel %vm478, %v524, 0.0
      %546 = vadd.xlane.f32.xlu0 %v545
      %v547 = vpop.xlane.xlu0 %546
      %v548 = vsel %vm478, %v526, 0.0
      %549 = vadd.xlane.f32.xlu0 %v548
      %v550 = vpop.xlane.xlu0 %549
      %v551 = vrcp.pop %v529
      %v552 = vmul.f32 %v529, %v551
      %v553 = vsub.f32 1.0, %v552
      %v554 = vmul.f32 %v551, %v553
      %v555 = vadd.f32 %v551, %v554
      %vm556 = vweird.f32 %v529
      %vm557 = vweird.f32 %v551
      %vm558 = vmor %vm556, %vm557
      %v559 = vsel %vm558, %v551, %v555
      %v560 = vand.u32 2147483647, %v529
      %vm561 = vcmp.eq.f32.partialorder %v560, 8.507059e+37
      %v562 = vand.u32 %v529, 2147483648
      %v563 = vor.u32 1.1754944e-38, %v562
      %v564 = vsel %vm561, %v563, %v559
      %v565 = vmul.f32 %v512, %v564
      %v566 = vrcp.pop %v532
      %v567 = vmul.f32 %v532, %v566
      %v568 = vsub.f32 1.0, %v567
      %v569 = vmul.f32 %v566, %v568
      %v570 = vadd.f32 %v566, %v569
      %vm571 = vweird.f32 %v532
      %vm572 = vweird.f32 %v566
      %vm573 = vmor %vm571, %vm572
      %v574 = vsel %vm573, %v566, %v570
      %v575 = vand.u32 2147483647, %v532
      %vm576 = vcmp.eq.f32.partialorder %v575, 8.507059e+37
      %v577 = vand.u32 %v532, 2147483648
      %v578 = vor.u32 1.1754944e-38, %v577
      %v579 = vsel %vm576, %v578, %v574
      %v580 = vmul.f32 %v514, %v579
      %v581 = vrcp.pop %v535
      %v582 = vmul.f32 %v535, %v581
      %v583 = vsub.f32 1.0, %v582
      %v584 = vmul.f32 %v581, %v583
      %v585 = vadd.f32 %v581, %v584
      %vm586 = vweird.f32 %v535
      %vm587 = vweird.f32 %v581
      %vm588 = vmor %vm586, %vm587
      %v589 = vsel %vm588, %v581, %v585
      %v590 = vand.u32 2147483647, %v535
      %vm591 = vcmp.eq.f32.partialorder %v590, 8.507059e+37
      %v592 = vand.u32 %v535, 2147483648
      %v593 = vor.u32 1.1754944e-38, %v592
      %v594 = vsel %vm591, %v593, %v589
      %v595 = vmul.f32 %v516, %v594
      %v596 = vrcp.pop %v538
      %v597 = vmul.f32 %v538, %v596
      %v598 = vsub.f32 1.0, %v597
      %v599 = vmul.f32 %v596, %v598
      %v600 = vadd.f32 %v596, %v599
      %vm601 = vweird.f32 %v538
      %vm602 = vweird.f32 %v596
      %vm603 = vmor %vm601, %vm602
      %v604 = vsel %vm603, %v596, %v600
      %v605 = vand.u32 2147483647, %v538
      %vm606 = vcmp.eq.f32.partialorder %v605, 8.507059e+37
      %v607 = vand.u32 %v538, 2147483648
      %v608 = vor.u32 1.1754944e-38, %v607
      %v609 = vsel %vm606, %v608, %v604
      %v610 = vmul.f32 %v518, %v609
      %v611 = vrcp.pop %v541
      %v612 = vmul.f32 %v541, %v611
      %v613 = vsub.f32 1.0, %v612
      %v614 = vmul.f32 %v611, %v613
      %v615 = vadd.f32 %v611, %v614
      %vm616 = vweird.f32 %v541
      %vm617 = vweird.f32 %v611
      %vm618 = vmor %vm616, %vm617
      %v619 = vsel %vm618, %v611, %v615
      %v620 = vand.u32 2147483647, %v541
      %vm621 = vcmp.eq.f32.partialorder %v620, 8.507059e+37
      %v622 = vand.u32 %v541, 2147483648
      %v623 = vor.u32 1.1754944e-38, %v622
      %v624 = vsel %vm621, %v623, %v619
      %v625 = vmul.f32 %v520, %v624
      %v626 = vrcp.pop %v544
      %v627 = vmul.f32 %v544, %v626
      %v628 = vsub.f32 1.0, %v627
      %v629 = vmul.f32 %v626, %v628
      %v630 = vadd.f32 %v626, %v629
      %vm631 = vweird.f32 %v544
      %vm632 = vweird.f32 %v626
      %vm633 = vmor %vm631, %vm632
      %v634 = vsel %vm633, %v626, %v630
      %v635 = vand.u32 2147483647, %v544
      %vm636 = vcmp.eq.f32.partialorder %v635, 8.507059e+37
      %v637 = vand.u32 %v544, 2147483648
      %v638 = vor.u32 1.1754944e-38, %v637
      %v639 = vsel %vm636, %v638, %v634
      %v640 = vmul.f32 %v522, %v639
      %v641 = vrcp.pop %v547
      %v642 = vmul.f32 %v547, %v641
      %v643 = vsub.f32 1.0, %v642
      %v644 = vmul.f32 %v641, %v643
      %v645 = vadd.f32 %v641, %v644
      %vm646 = vweird.f32 %v547
      %vm647 = vweird.f32 %v641
      %vm648 = vmor %vm646, %vm647
      %v649 = vsel %vm648, %v641, %v645
      %v650 = vand.u32 2147483647, %v547
      %vm651 = vcmp.eq.f32.partialorder %v650, 8.507059e+37
      %v652 = vand.u32 %v547, 2147483648
      %v653 = vor.u32 1.1754944e-38, %v652
      %v654 = vsel %vm651, %v653, %v649
      %v655 = vmul.f32 %v524, %v654
      %v656 = vrcp.pop %v550
      %v657 = vmul.f32 %v550, %v656
      %v658 = vsub.f32 1.0, %v657
      %v659 = vmul.f32 %v656, %v658
      %v660 = vadd.f32 %v656, %v659
      %vm661 = vweird.f32 %v550
      %vm662 = vweird.f32 %v656
      %vm663 = vmor %vm661, %vm662
      %v664 = vsel %vm663, %v656, %v660
      %v665 = vand.u32 2147483647, %v550
      %vm666 = vcmp.eq.f32.partialorder %v665, 8.507059e+37
      %v667 = vand.u32 %v550, 2147483648
      %v668 = vor.u32 1.1754944e-38, %v667
      %v669 = vsel %vm666, %v668, %v664
      %v670 = vmul.f32 %v526, %v669
      %v671 = vrot.slane %v625, 4
      %vm672 = vcmask 1047556
      %v673 = vsel %vm672, %v671, %v565
      %v674 = vrot.slane %v565, 4
      %v675 = vsel %vm672, %v625, %v674
      %v677 = vunpack.c.l.s4 1983009808
      %v678 = vunpack.c.0.s8 %v677
      %v679 = vperm.slane %v673, %v678
      %v681 = vunpack.c.l.s4 1983009808
      %v682 = vunpack.c.0.s8 %v681
      %v683 = vperm.slane %v675, %v682
      %v684 = vrot.slane %v655, 4
      %v685 = vsel %vm672, %v684, %v595
      %v686 = vrot.slane %v595, 4
      %v687 = vsel %vm672, %v655, %v686
      %v689 = vunpack.c.l.s4 1983009808
      %v690 = vunpack.c.0.s8 %v689
      %v691 = vperm.slane %v685, %v690
      %v693 = vunpack.c.l.s4 1983009808
      %v694 = vunpack.c.0.s8 %v693
      %v695 = vperm.slane %v687, %v694
      %v696 = vrot.slane %v691, 4
      %v697 = vsel %vm672, %v696, %v679
      %v698 = vrot.slane %v679, 4
      %v699 = vsel %vm672, %v691, %v698
      %v701 = vunpack.c.l.s4 1934713408
      %v702 = vunpack.c.0.s8 %v701
      %v703 = vperm.slane %v697, %v702
      %v705 = vunpack.c.l.s4 1934713408
      %v706 = vunpack.c.0.s8 %v705
      %v707 = vperm.slane %v699, %v706
      %v708 = vrot.slane %v695, 4
      %v709 = vsel %vm672, %v708, %v683
      %v710 = vrot.slane %v683, 4
      %v711 = vsel %vm672, %v695, %v710
      %v713 = vunpack.c.l.s4 1934713408
      %v714 = vunpack.c.0.s8 %v713
      %v715 = vperm.slane %v709, %v714
      %v717 = vunpack.c.l.s4 1934713408
      %v718 = vunpack.c.0.s8 %v717
      %v719 = vperm.slane %v711, %v718
      %v720 = vrot.slane %v703, 4
      %v721 = vsel %vm672, 0.0, %v720
      %v722 = vrot.slane %v707, 4
      %v723 = vsel %vm672, 0.0, %v722
      %v724 = vrot.slane %v715, 4
      %v725 = vsel %vm672, 0.0, %v724
      %v726 = vrot.slane %v719, 4
      %v727 = vsel %vm672, 0.0, %v726
      %v728 = vrot.slane %v640, 4
      %v729 = vsel %vm672, %v728, %v580
      %v730 = vrot.slane %v580, 4
      %v731 = vsel %vm672, %v640, %v730
      %v733 = vunpack.c.l.s4 1983009808
      %v734 = vunpack.c.0.s8 %v733
      %v735 = vperm.slane %v729, %v734
      %v737 = vunpack.c.l.s4 1983009808
      %v738 = vunpack.c.0.s8 %v737
      %v739 = vperm.slane %v731, %v738
      %v740 = vrot.slane %v670, 4
      %v741 = vsel %vm672, %v740, %v610
      %v742 = vrot.slane %v610, 4
      %v743 = vsel %vm672, %v670, %v742
      %v745 = vunpack.c.l.s4 1983009808
      %v746 = vunpack.c.0.s8 %v745
      %v747 = vperm.slane %v741, %v746
      %v749 = vunpack.c.l.s4 1983009808
      %v750 = vunpack.c.0.s8 %v749
      %v751 = vperm.slane %v743, %v750
      %v752 = vrot.slane %v747, 4
      %v753 = vsel %vm672, %v752, %v735
      %v754 = vrot.slane %v735, 4
      %v755 = vsel %vm672, %v747, %v754
      %v757 = vunpack.c.l.s4 1934713408
      %v758 = vunpack.c.0.s8 %v757
      %v759 = vperm.slane %v753, %v758
      %v761 = vunpack.c.l.s4 1934713408
      %v762 = vunpack.c.0.s8 %v761
      %v763 = vperm.slane %v755, %v762
      %v764 = vrot.slane %v751, 4
      %v765 = vsel %vm672, %v764, %v739
      %v766 = vrot.slane %v739, 4
      %v767 = vsel %vm672, %v751, %v766
      %v769 = vunpack.c.l.s4 1934713408
      %v770 = vunpack.c.0.s8 %v769
      %v771 = vperm.slane %v765, %v770
      %v773 = vunpack.c.l.s4 1934713408
      %v774 = vunpack.c.0.s8 %v773
      %v775 = vperm.slane %v767, %v774
      %v776 = vrot.slane %v759, 4
      %v777 = vsel %vm672, 0.0, %v776
      %v778 = vrot.slane %v763, 4
      %v779 = vsel %vm672, 0.0, %v778
      %v780 = vrot.slane %v771, 4
      %v781 = vsel %vm672, 0.0, %v780
      %v782 = vrot.slane %v775, 4
      %v783 = vsel %vm672, 0.0, %v782
      %785 = vrot.lane.b32.xlu0 %v721, 16
      %v786 = vpop.permute.xlu0 %785
      %789 = vrot.lane.b32.xlu0 %v707, 32
      %v790 = vpop.permute.xlu0 %789
      %793 = vrot.lane.b32.xlu0 %v723, 48
      %v794 = vpop.permute.xlu0 %793
      %797 = vrot.lane.b32.xlu0 %v715, 64
      %v798 = vpop.permute.xlu0 %797
      %801 = vrot.lane.b32.xlu0 %v725, 80
      %v802 = vpop.permute.xlu0 %801
      %805 = vrot.lane.b32.xlu0 %v719, 96
      %v806 = vpop.permute.xlu0 %805
      %809 = vrot.lane.b32.xlu0 %v727, 112
      %v810 = vpop.permute.xlu0 %809
      %813 = vrot.lane.b32.xlu0 %v777, 16
      %v814 = vpop.permute.xlu0 %813
      %817 = vrot.lane.b32.xlu0 %v763, 32
      %v818 = vpop.permute.xlu0 %817
      %821 = vrot.lane.b32.xlu0 %v779, 48
      %v822 = vpop.permute.xlu0 %821
      %825 = vrot.lane.b32.xlu0 %v771, 64
      %v826 = vpop.permute.xlu0 %825
      %829 = vrot.lane.b32.xlu0 %v781, 80
      %v830 = vpop.permute.xlu0 %829
      %833 = vrot.lane.b32.xlu0 %v775, 96
      %v834 = vpop.permute.xlu0 %833
      %837 = vrot.lane.b32.xlu0 %v783, 112
      %v838 = vpop.permute.xlu0 %837
      %v840 = vsel %vm478, %v703, %v786
      %vm841 = vcmask 261120
      %v842 = vsel %vm841, %v840, %v790
      %vm843 = vcmask 392192
      %v844 = vsel %vm843, %v842, %v794
      %vm845 = vcmask 523264
      %v846 = vsel %vm845, %v844, %v798
      %vm847 = vcmask 654336
      %v848 = vsel %vm847, %v846, %v802
      %vm849 = vcmask 785408
      %v850 = vsel %vm849, %v848, %v806
      %vm851 = vcmask 916480
      %v852 = vsel %vm851, %v850, %v810
      %v853 = vsel %vm478, %v759, %v814
      %v854 = vsel %vm841, %v853, %v818
      %v855 = vsel %vm843, %v854, %v822
      %v856 = vsel %vm845, %v855, %v826
      %v857 = vsel %vm847, %v856, %v830
      %v858 = vsel %vm849, %v857, %v834
      %v859 = vsel %vm851, %v858, %v838
      %v862 = vrot.slane %v859, 4
      %vm863 = vcmask 1043456
      %v864 = vsel %vm863, %v852, %v862
      %866 = vst [vmem:[%s299] sm:$0xff] %v864
      %v868 = vsel %vm478, %v565, 0
      %v871 = vsel %vm478, %v580, 0
      %873 = vmatpush.msra.mxu0 0.0
      %874 = vmatpush.msra.mxu0 0.0
      %875 = vmatpush.msra.mxu0 0.0
      %876 = vmatpush.msra.mxu0 0.0
      %877 = vmatpush.msra.mxu0 0.0
      %878 = vmatpush.msra.mxu0 0.0
      %879 = vmatpush.msra.mxu0 0.0
      %880 = vmatpush.msra.mxu0 0.0
      %881 = vmatpush.msra.mxu0 0.0
      %882 = vmatpush.msra.mxu0 0.0
      %883 = vmatpush.msra.mxu0 0.0
      %884 = vmatpush.msra.mxu0 0.0
      %885 = vmatpush.msra.mxu0 0.0
      %886 = vmatpush.msra.mxu0 0.0
      %887 = vmatpush.msra.mxu0 %v322
      %888 = vmatpush.msra.mxu0 %v321
      %889 = vmatmul.f32.gmra.mxu0 %v868
      %v890 = vpop.f32.mrf.mxu0
      %v891 = vadd.f32 0.0, %v890
      %892 = vmatmul.f32.gmra.mxu0 %v871
      %v893 = vpop.f32.mrf.mxu0
      %v894 = vadd.f32 0.0, %v893
      %895 = vdwg.mxu0
      %v897 = vsel %vm478, %v595, 0
      %v900 = vsel %vm478, %v610, 0
      %902 = vmatpush.msra.mxu0 0.0
      %903 = vmatpush.msra.mxu0 0.0
      %904 = vmatpush.msra.mxu0 0.0
      %905 = vmatpush.msra.mxu0 0.0
      %906 = vmatpush.msra.mxu0 0.0
      %907 = vmatpush.msra.mxu0 0.0
      %908 = vmatpush.msra.mxu0 0.0
      %909 = vmatpush.msra.mxu0 0.0
      %910 = vmatpush.msra.mxu0 0.0
      %911 = vmatpush.msra.mxu0 0.0
      %912 = vmatpush.msra.mxu0 0.0
      %913 = vmatpush.msra.mxu0 0.0
      %914 = vmatpush.msra.mxu0 0.0
      %915 = vmatpush.msra.mxu0 0.0
      %916 = vmatpush.msra.mxu0 %v324
      %917 = vmatpush.msra.mxu0 %v323
      %918 = vmatmul.f32.gmra.mxu0 %v897
      %v919 = vpop.f32.mrf.mxu0
      %v920 = vadd.f32 0.0, %v919
      %921 = vmatmul.f32.gmra.mxu0 %v900
      %v922 = vpop.f32.mrf.mxu0
      %v923 = vadd.f32 0.0, %v922
      %924 = vdwg.mxu0
      %v926 = vsel %vm478, %v625, 0
      %v929 = vsel %vm478, %v640, 0
      %931 = vmatpush.msra.mxu0 0.0
      %932 = vmatpush.msra.mxu0 0.0
      %933 = vmatpush.msra.mxu0 0.0
      %934 = vmatpush.msra.mxu0 0.0
      %935 = vmatpush.msra.mxu0 0.0
      %936 = vmatpush.msra.mxu0 0.0
      %937 = vmatpush.msra.mxu0 0.0
      %938 = vmatpush.msra.mxu0 0.0
      %939 = vmatpush.msra.mxu0 0.0
      %940 = vmatpush.msra.mxu0 0.0
      %941 = vmatpush.msra.mxu0 0.0
      %942 = vmatpush.msra.mxu0 0.0
      %943 = vmatpush.msra.mxu0 0.0
      %944 = vmatpush.msra.mxu0 0.0
      %945 = vmatpush.msra.mxu0 %v326
      %946 = vmatpush.msra.mxu0 %v325
      %947 = vmatmul.f32.gmra.mxu0 %v926
      %v948 = vpop.f32.mrf.mxu0
      %v949 = vadd.f32 0.0, %v948
      %950 = vmatmul.f32.gmra.mxu0 %v929
      %v951 = vpop.f32.mrf.mxu0
      %v952 = vadd.f32 0.0, %v951
      %953 = vdwg.mxu0
      %v955 = vsel %vm478, %v655, 0
      %v958 = vsel %vm478, %v670, 0
      %960 = vmatpush.msra.mxu0 0.0
      %961 = vmatpush.msra.mxu0 0.0
      %962 = vmatpush.msra.mxu0 0.0
      %963 = vmatpush.msra.mxu0 0.0
      %964 = vmatpush.msra.mxu0 0.0
      %965 = vmatpush.msra.mxu0 0.0
      %966 = vmatpush.msra.mxu0 0.0
      %967 = vmatpush.msra.mxu0 0.0
      %968 = vmatpush.msra.mxu0 0.0
      %969 = vmatpush.msra.mxu0 0.0
      %970 = vmatpush.msra.mxu0 0.0
      %971 = vmatpush.msra.mxu0 0.0
      %972 = vmatpush.msra.mxu0 0.0
      %973 = vmatpush.msra.mxu0 0.0
      %974 = vmatpush.msra.mxu0 %v328
      %975 = vmatpush.msra.mxu0 %v327
      %976 = vmatmul.f32.gmra.mxu0 %v955
      %v977 = vpop.f32.mrf.mxu0
      %v978 = vadd.f32 0.0, %v977
      %979 = vmatmul.f32.gmra.mxu0 %v958
      %v980 = vpop.f32.mrf.mxu0
      %v981 = vadd.f32 0.0, %v980
      %982 = vdwg.mxu0
      %v983 = vld [vmem:[%s3] sm:$0xff]
      %v984 = vld [vmem:[%s3 + $0x8] sm:$0xff]
      %v985 = vld [vmem:[%s3 + $0x10] sm:$0xff]
      %v986 = vld [vmem:[%s3 + $0x18] sm:$0xff]
      %v988 = vsel %vm337, %v920, 0
      %v991 = vsel %vm337, %v923, 0
      %993 = vmatpush.msra.mxu0 0.0
      %994 = vmatpush.msra.mxu0 0.0
      %995 = vmatpush.msra.mxu0 0.0
      %996 = vmatpush.msra.mxu0 0.0
      %997 = vmatpush.msra.mxu0 0.0
      %998 = vmatpush.msra.mxu0 0.0
      %999 = vmatpush.msra.mxu0 0.0
      %1000 = vmatpush.msra.mxu0 0.0
      %1001 = vmatpush.msra.mxu0 0.0
      %1002 = vmatpush.msra.mxu0 0.0
      %1003 = vmatpush.msra.mxu0 0.0
      %1004 = vmatpush.msra.mxu0 0.0
      %1005 = vmatpush.msra.mxu0 0.0
      %1006 = vmatpush.msra.mxu0 0.0
      %1007 = vmatpush.msra.mxu0 0.0
      %1008 = vmatpush.msra.mxu0 %v984
      %1009 = vmatmul.f32.gmra.mxu0 %v988
      %v1010 = vpop.f32.mrf.mxu0
      %v1011 = vadd.f32 0.0, %v1010
      %1012 = vmatmul.f32.gmra.mxu0 %v991
      %v1013 = vpop.f32.mrf.mxu0
      %v1014 = vadd.f32 0.0, %v1013
      %1015 = vdwg.mxu0
      %v1017 = vsel %vm337, %v891, 0
      %v1020 = vsel %vm337, %v894, 0
      %1022 = vmatpush.msra.mxu0 0.0
      %1023 = vmatpush.msra.mxu0 0.0
      %1024 = vmatpush.msra.mxu0 0.0
      %1025 = vmatpush.msra.mxu0 0.0
      %1026 = vmatpush.msra.mxu0 0.0
      %1027 = vmatpush.msra.mxu0 0.0
      %1028 = vmatpush.msra.mxu0 0.0
      %1029 = vmatpush.msra.mxu0 0.0
      %1030 = vmatpush.msra.mxu0 0.0
      %1031 = vmatpush.msra.mxu0 0.0
      %1032 = vmatpush.msra.mxu0 0.0
      %1033 = vmatpush.msra.mxu0 0.0
      %1034 = vmatpush.msra.mxu0 0.0
      %1035 = vmatpush.msra.mxu0 0.0
      %1036 = vmatpush.msra.mxu0 0.0
      %1037 = vmatpush.msra.mxu0 %v983
      %1038 = vmatmul.f32.gmra.mxu0 %v1017
      %v1039 = vpop.f32.mrf.mxu0
      %v1040 = vadd.f32 %v1011, %v1039
      %1041 = vmatmul.f32.gmra.mxu0 %v1020
      %v1042 = vpop.f32.mrf.mxu0
      %v1043 = vadd.f32 %v1014, %v1042
      %1044 = vdwg.mxu0
      %v1046 = vsel %vm337, %v949, 0
      %v1049 = vsel %vm337, %v952, 0
      %1051 = vmatpush.msra.mxu0 0.0
      %1052 = vmatpush.msra.mxu0 0.0
      %1053 = vmatpush.msra.mxu0 0.0
      %1054 = vmatpush.msra.mxu0 0.0
      %1055 = vmatpush.msra.mxu0 0.0
      %1056 = vmatpush.msra.mxu0 0.0
      %1057 = vmatpush.msra.mxu0 0.0
      %1058 = vmatpush.msra.mxu0 0.0
      %1059 = vmatpush.msra.mxu0 0.0
      %1060 = vmatpush.msra.mxu0 0.0
      %1061 = vmatpush.msra.mxu0 0.0
      %1062 = vmatpush.msra.mxu0 0.0
      %1063 = vmatpush.msra.mxu0 0.0
      %1064 = vmatpush.msra.mxu0 0.0
      %1065 = vmatpush.msra.mxu0 0.0
      %1066 = vmatpush.msra.mxu0 %v985
      %1067 = vmatmul.f32.gmra.mxu0 %v1046
      %v1068 = vpop.f32.mrf.mxu0
      %v1069 = vadd.f32 0.0, %v1068
      %1070 = vmatmul.f32.gmra.mxu0 %v1049
      %v1071 = vpop.f32.mrf.mxu0
      %v1072 = vadd.f32 0.0, %v1071
      %1073 = vdwg.mxu0
      %v1074 = vadd.f32 %v1040, %v1069
      %v1075 = vadd.f32 %v1043, %v1072
      %v1077 = vsel %vm337, %v978, 0
      %v1080 = vsel %vm337, %v981, 0
      %1082 = vmatpush.msra.mxu0 0.0
      %1083 = vmatpush.msra.mxu0 0.0
      %1084 = vmatpush.msra.mxu0 0.0
      %1085 = vmatpush.msra.mxu0 0.0
      %1086 = vmatpush.msra.mxu0 0.0
      %1087 = vmatpush.msra.mxu0 0.0
      %1088 = vmatpush.msra.mxu0 0.0
      %1089 = vmatpush.msra.mxu0 0.0
      %1090 = vmatpush.msra.mxu0 0.0
      %1091 = vmatpush.msra.mxu0 0.0
      %1092 = vmatpush.msra.mxu0 0.0
      %1093 = vmatpush.msra.mxu0 0.0
      %1094 = vmatpush.msra.mxu0 0.0
      %1095 = vmatpush.msra.mxu0 0.0
      %1096 = vmatpush.msra.mxu0 0.0
      %1097 = vmatpush.msra.mxu0 %v986
      %1098 = vmatmul.f32.gmra.mxu0 %v1077
      %v1099 = vpop.f32.mrf.mxu0
      %v1100 = vadd.f32 0.0, %v1099
      %1101 = vmatmul.f32.gmra.mxu0 %v1080
      %v1102 = vpop.f32.mrf.mxu0
      %v1103 = vadd.f32 0.0, %v1102
      %1104 = vdwg.mxu0
      %v1105 = vadd.f32 %v1074, %v1100
      %v1106 = vadd.f32 %v1075, %v1103
      %v1107 = vld [vmem:[%s4] sm:$0x1]
      %v1109 = vperm.slane %v1107, 0
      %v1111 = vadd.f32 %v1105, %v1109
      %v1112 = vadd.f32 %v1106, %v1109
      %1113 = vst.msk [vmem:[%s304] sm:$0xff] %vm841, %v1111
      %1114 = vst.msk [vmem:[%s304 + $0x8] sm:$0xff] %vm841, %v1112
      %p1115 = scmp.lt.s32.totalorder %s18, 1
      %s1116 = scalar_select %p1115, %s18, 1
      %s1117 = smul.addr %s1116, 2
      %s1118 = smul.addr %s1117, 4
      %s1119 = scalar_lea.vmem %s5, %s1118
      %p1120 = scmp.lt.s32.totalorder %s18, 1
      %s1121 = scalar_select %p1120, %s18, 1
      %s1122 = smul.addr %s1121, 2
      %s1123 = smul.addr %s1122, 8
      %s1124 = scalar_lea.vmem %s6, %s1123
      // Predicated region
      $region41: #{_lambda_.2} parent=39 // pred_check
        %p1125 = pneg %p156
      $region42: #{_lambda_.2} parent=39 // pred_check_branch
        %1127 = sbr.rel (%p1125) target = $region44
      $region43: #{_lambda_.2} parent=39 // pred_region
        _
      $region44: #{_lambda_.2} parent=39 // pred_fallthru
        _
      // Predicated region
      $region45: #{_lambda_.2} parent=39 // pred_check
        %p1128 = pneg %p182
      $region46: #{_lambda_.2} parent=39 // pred_check_branch
        %1130 = sbr.rel (%p1128) target = $region48
      $region47: #{_lambda_.2} parent=39 // pred_region
        _
      $region48: #{_lambda_.2} parent=39 // pred_fallthru
        _
    $region40: #{_lambda_.2} parent=5 // pred_fallthru
      _
    %p1131 = scmp.le.s32.totalorder 2, %s13
    // Predicated region
    $region49: #{_lambda_.2} parent=5 // pred_check
      %p1132 = pneg %p1131
    $region50: #{_lambda_.2} parent=5 // pred_check_branch
      %1134 = sbr.rel (%p1132) target = $region52
    $region51: #{_lambda_.2} parent=5 // pred_region
      %s1135 = ssub.s32 %s13, 2
      // Predicated region
      $region53: #{_lambda_.2} parent=51 // pred_check
        %p1136 = pneg %p162
      $region54: #{_lambda_.2} parent=51 // pred_check_branch
        %1138 = sbr.rel (%p1136) target = $region56
      $region55: #{_lambda_.2} parent=51 // pred_region
        %p1139 = scmp.lt.s32.totalorder %s19, 1
        %s1140 = scalar_select %p1139, %s19, 1
        %s1141 = smul.addr %s1140, 2
        %s1142 = smul.addr %s1141, 4
        %s1143 = scalar_lea.vmem %s5, %s1142
      $region56: #{_lambda_.2} parent=51 // pred_fallthru
        _
      // Predicated region
      $region57: #{_lambda_.2} parent=51 // pred_check
        %p1144 = pneg %p188
      $region58: #{_lambda_.2} parent=51 // pred_check_branch
        %1146 = sbr.rel (%p1144) target = $region60
      $region59: #{_lambda_.2} parent=51 // pred_region
        %p1147 = scmp.lt.s32.totalorder %s19, 1
        %s1148 = scalar_select %p1147, %s19, 1
        %s1149 = smul.addr %s1148, 2
        %s1150 = smul.addr %s1149, 8
        %s1151 = scalar_lea.vmem %s6, %s1150
      $region60: #{_lambda_.2} parent=51 // pred_fallthru
        _
    $region52: #{_lambda_.2} parent=5 // pred_fallthru
      _
  $region6: #{_lambda_.2} parent=0 // loop_footer
    %s17 = sadd.s32 1, %s13
  $region7: #{_lambda_.2} parent=0 // loop_footer_branch
    %12 = sbr.rel target = $region3
  $region8: #{_lambda_.2} parent=0 // loop_exit
    _

</llo_original>
